<compile_context>
chip_gen: v7x
topology: tpu7x:2x2x1
jax: 0.10.0
libtpu: 0.0.40
codegen_flags: <defaults>
</compile_context>

<pallas_src>
import jax
import jax.numpy as jnp
from jax.experimental import pallas as pl
from jax.experimental.pallas import tpu as pltpu

_INV_SQRT2 = 0.7071067811865476


def aff_kernel(vis_ref, text_ref, w_hf_ref, w1l_ref, w1g_ref, w2l_ref, w2g_ref,
               vec_c_ref, vec_m_ref, mix_ref, out_ref):
    BHW = vis_ref.shape[0]
    B, Cout = text_ref.shape
    HW = BHW // B

    x = vis_ref[...].astype(jnp.float32)        # (B*HW, Cin)
    text = text_ref[...].astype(jnp.float32)    # (B, Cout)
    b_hf = vec_c_ref[0:1, :]                    # (1, Cout)  HF_conv bias
    t2 = vec_c_ref[1:2, :]                      # (1, Cout)  summed second-conv BN shifts
    t1l = vec_m_ref[0:1, :]                     # (1, Cmid)  local first-conv BN shift
    t1g = vec_m_ref[1:2, :]                     # (1, Cmid)  global first-conv BN shift

    # One-hot batch selector (BHW, B) and mean-pool matrix (B, BHW), built on-chip
    # (compare-based, no integer division). Broadcasts / per-batch reductions then
    # become tiny MXU matmuls instead of sublane-ragged relayouts.
    r = jax.lax.broadcasted_iota(jnp.int32, (BHW, B), 0)
    c = jax.lax.broadcasted_iota(jnp.int32, (BHW, B), 1)
    sel = ((r >= c * HW) & (r < (c + 1) * HW)).astype(jnp.float32)
    rp = jax.lax.broadcasted_iota(jnp.int32, (B, BHW), 1)
    cp = jax.lax.broadcasted_iota(jnp.int32, (B, BHW), 0)
    pool = jnp.where((rp >= cp * HW) & (rp < (cp + 1) * HW), 1.0 / HW, 0.0)

    # HF_conv: 1x1 conv == matmul + bias.
    vis_c = jnp.dot(x, w_hf_ref[...], preferred_element_type=jnp.float32) + b_hf   # (BHW, Cout)

    # ---- global_att branch: pool FIRST (as in the module), then tiny per-batch convs.
    # mean(add) = mean(vis_c) + text   (text is constant over the 7x7 grid per batch)
    g = jnp.dot(pool, vis_c, preferred_element_type=jnp.float32) + text            # (B, Cout)
    h_g = jnp.maximum(
        jnp.dot(g, w1g_ref[...], preferred_element_type=jnp.float32) + t1g, 0.0)   # (B, Cmid)
    glob = jnp.dot(h_g, w2g_ref[...], preferred_element_type=jnp.float32) + t2     # (B, Cout)

    # ---- local_att branch: per-position; text/bias contributions broadcast via `sel`
    # relu(add @ w1l + t1l) == relu(vis_c @ w1l + sel @ (text @ w1l + t1l))
    tl = jnp.dot(text, w1l_ref[...], preferred_element_type=jnp.float32) + t1l     # (B, Cmid)
    h_l = jnp.maximum(
        jnp.dot(vis_c, w1l_ref[...], preferred_element_type=jnp.float32)
        + jnp.dot(sel, tl, preferred_element_type=jnp.float32), 0.0)               # (BHW, Cmid)
    gl = (jnp.dot(h_l, w2l_ref[...], preferred_element_type=jnp.float32)
          + jnp.dot(sel, glob, preferred_element_type=jnp.float32))                # (BHW, Cout)
    scores = jax.nn.sigmoid(gl)

    # Attention mix folded into the pooled reduction (inter/att never materialized):
    # pooled = mean(2*vis_c*s + 2*text*(1-s)) = 2*(mean(vis_c*s) + text*(1 - mean(s)))
    p_vs = jnp.dot(pool, vis_c * scores, preferred_element_type=jnp.float32)       # (B, Cout)
    p_s = jnp.dot(pool, scores, preferred_element_type=jnp.float32)                # (B, Cout)
    pooled = 2.0 * (p_vs + text * (1.0 - p_s))

    # exact GELU (erf form; matches nn.GELU default)
    gelu = 0.5 * pooled * (1.0 + jax.lax.erf(pooled * _INV_SQRT2))

    mix = mix_ref[0]                                                               # scalar from SMEM
    out_ref[...] = (mix * gelu + (1.0 - mix) * text).astype(out_ref.dtype)


def aff_forward(vis, text, pk):
    """vis: (B, HW, Cin) f32, text: (B, Cout) f32, pk: packed params -> (B, Cout) f32."""
    B, HW, Cin = vis.shape
    Cout = text.shape[1]
    x = vis.reshape(B * HW, Cin)   # free reshape outside the kernel (collapse major dims)

    vmem = pl.BlockSpec(memory_space=pltpu.MemorySpace.VMEM)
    smem = pl.BlockSpec(memory_space=pltpu.MemorySpace.SMEM)

    return pl.pallas_call(
        aff_kernel,
        out_shape=jax.ShapeDtypeStruct((B, Cout), jnp.float32),
        in_specs=[vmem, vmem, vmem, vmem, vmem, vmem, vmem, vmem, vmem, smem],
        out_specs=vmem,
    )(x, text, pk["w_hf"], pk["w1l"], pk["w1g"], pk["w2l"], pk["w2g"],
      pk["vec_c"], pk["vec_m"], pk["mix"])


def _fold_bn(bias, gamma, beta, mean, var, eps=1e-5):
    s = gamma / jnp.sqrt(var + eps)
    t = (bias - mean) * s + beta
    return s.reshape(1, -1).astype(jnp.float32), t.reshape(1, -1).astype(jnp.float32)


def make_params(key, cin, cout, cmid):
    ks = jax.random.split(key, 16)

    def w(k, shape, scale=0.05):
        return (scale * jax.random.normal(k, shape)).astype(jnp.float32)

    def bn(k, c):
        k1, k2, k3, k4 = jax.random.split(k, 4)
        gamma = 1.0 + 0.1 * jax.random.normal(k1, (c,))
        beta = 0.05 * jax.random.normal(k2, (c,))
        mean = 0.05 * jax.random.normal(k3, (c,))
        var = jax.random.uniform(k4, (c,), minval=0.5, maxval=1.5)
        return gamma, beta, mean, var

    params = {}
    params["w_hf"] = w(ks[0], (cin, cout))
    params["b_hf"] = w(ks[1], (1, cout), 0.02)

    # local_att
    w_l1 = w(ks[2], (cout, cmid)); b_l1 = w(ks[3], (cmid,), 0.02)
    s_l1, t_l1 = _fold_bn(b_l1, *bn(ks[4], cmid))
    w_l2 = w(ks[5], (cmid, cout)); b_l2 = w(ks[6], (cout,), 0.02)
    s_l2, t_l2 = _fold_bn(b_l2, *bn(ks[7], cout))
    params.update(w_l1=w_l1, s_l1=s_l1, t_l1=t_l1, w_l2=w_l2, s_l2=s_l2, t_l2=t_l2)

    # global_att
    w_g1 = w(ks[8], (cout, cmid)); b_g1 = w(ks[9], (cmid,), 0.02)
    s_g1, t_g1 = _fold_bn(b_g1, *bn(ks[10], cmid))
    w_g2 = w(ks[11], (cmid, cout)); b_g2 = w(ks[12], (cout,), 0.02)
    s_g2, t_g2 = _fold_bn(b_g2, *bn(ks[13], cout))
    params.update(w_g1=w_g1, s_g1=s_g1, t_g1=t_g1, w_g2=w_g2, s_g2=s_g2, t_g2=t_g2)

    params["mix"] = jnp.full((1, 1), 0.01, jnp.float32)  # nn.Parameter(torch.tensor(0.01))
    return params


def pack_params(p):
    """Fold BN scales into the 1x1-conv weights; pack the small per-channel shifts."""
    w1l = (p["w_l1"] * p["s_l1"]).astype(jnp.float32)       # (Cout, Cmid)
    w1g = (p["w_g1"] * p["s_g1"]).astype(jnp.float32)       # (Cout, Cmid)
    w2l = (p["w_l2"] * p["s_l2"]).astype(jnp.float32)       # (Cmid, Cout)
    w2g = (p["w_g2"] * p["s_g2"]).astype(jnp.float32)       # (Cmid, Cout)
    t2 = p["t_l2"] + p["t_g2"]                               # (1, Cout)
    vec_c = jnp.concatenate([p["b_hf"], t2], axis=0).astype(jnp.float32)            # (2, Cout)
    vec_m = jnp.concatenate([p["t_l1"], p["t_g1"]], axis=0).astype(jnp.float32)     # (2, Cmid)
    return {
        "w_hf": p["w_hf"].astype(jnp.float32),
        "w1l": w1l, "w1g": w1g, "w2l": w2l, "w2g": w2g,
        "vec_c": vec_c, "vec_m": vec_m,
        "mix": p["mix"].reshape(-1).astype(jnp.float32),                            # (1,) in SMEM
    }


def aff_reference(vis, text, p):
    """Pure-JAX reference of the original (unfused) math, for validation."""
    vis_c = jnp.einsum("bpi,io->bpo", vis, p["w_hf"]) + p["b_hf"]
    inter = jnp.broadcast_to(text[:, None, :], vis_c.shape)
    add = vis_c + inter
    h = jnp.maximum(jnp.einsum("bpi,io->bpo", add, p["w_l1"]) * p["s_l1"] + p["t_l1"], 0.0)
    local = jnp.einsum("bpi,io->bpo", h, p["w_l2"]) * p["s_l2"] + p["t_l2"]
    g = jnp.mean(add, axis=1, keepdims=True)
    gh = jnp.maximum(jnp.einsum("bpi,io->bpo", g, p["w_g1"]) * p["s_g1"] + p["t_g1"], 0.0)
    glob = jnp.einsum("bpi,io->bpo", gh, p["w_g2"]) * p["s_g2"] + p["t_g2"]
    scores = jax.nn.sigmoid(local + glob)
    att = 2.0 * vis_c * scores + 2.0 * inter * (1.0 - scores)
    pooled = jnp.mean(att, axis=1)
    gelu = 0.5 * pooled * (1.0 + jax.lax.erf(pooled * _INV_SQRT2))
    mix = p["mix"][0, 0]
    return mix * gelu + (1.0 - mix) * text


if __name__ == "__main__":
    # Small shapes consistent with the module: 7x7 spatial (hardcoded by the
    # .repeat(1,1,7,7)), scaled-down channel counts (Cin=96 -> Cout=128, r=4).
    B, H, W = 2, 7, 7
    CIN, COUT, R = 96, 128, 4
    CMID = COUT // R

    key = jax.random.PRNGKey(0)
    k_vis, k_txt, k_par = jax.random.split(key, 3)

    vis_nchw = jax.random.normal(k_vis, (B, CIN, H, W), jnp.float32)      # PyTorch NCHW input
    vis = jnp.transpose(vis_nchw, (0, 2, 3, 1)).reshape(B, H * W, CIN)    # -> (B, HW, Cin)
    text = jax.random.normal(k_txt, (B, COUT), jnp.float32)

    params = make_params(k_par, CIN, COUT, CMID)
    packed = pack_params(params)

    out = aff_forward(vis, text, packed)
    out = jax.block_until_ready(out)

    ref = aff_reference(vis, text, params)
    assert out.shape == (B, COUT)
    assert bool(jnp.all(jnp.isfinite(out)))
    assert bool(jnp.allclose(out, ref, rtol=1e-4, atol=1e-4)), "mismatch vs JAX reference"

    print("KERNEL_OK")
</pallas_src>

<mosaic_0001>
module attributes {stable_mosaic.version = 11 : i64} {
  func.func @aff_kernel(%arg0: memref<98x96xf32, #tpu.memory_space<vmem>>, %arg1: memref<2x128xf32, #tpu.memory_space<vmem>>, %arg2: memref<96x128xf32, #tpu.memory_space<vmem>>, %arg3: memref<128x32xf32, #tpu.memory_space<vmem>>, %arg4: memref<128x32xf32, #tpu.memory_space<vmem>>, %arg5: memref<32x128xf32, #tpu.memory_space<vmem>>, %arg6: memref<32x128xf32, #tpu.memory_space<vmem>>, %arg7: memref<2x128xf32, #tpu.memory_space<vmem>>, %arg8: memref<2x32xf32, #tpu.memory_space<vmem>>, %arg9: memref<1xf32, #tpu.memory_space<smem>>, %arg10: memref<2x128xf32, #tpu.memory_space<vmem>>) attributes {dimension_semantics = [], scalar_prefetch = 0 : i64, scratch_operands = 0 : i64, tpu.core_type = #tpu.core_type<tc>} {
    %c0 = arith.constant 0 : index
    %c0_0 = arith.constant 0 : index
    %0 = vector.load %arg0[%c0, %c0_0] : memref<98x96xf32, #tpu.memory_space<vmem>>, vector<98x96xf32>
    %c0_1 = arith.constant 0 : index
    %c0_2 = arith.constant 0 : index
    %1 = vector.load %arg1[%c0_1, %c0_2] : memref<2x128xf32, #tpu.memory_space<vmem>>, vector<2x128xf32>
    %c0_3 = arith.constant 0 : index
    %c0_4 = arith.constant 0 : index
    %2 = vector.load %arg7[%c0_3, %c0_4] : memref<2x128xf32, #tpu.memory_space<vmem>>, vector<1x128xf32>
    %c1 = arith.constant 1 : index
    %c0_5 = arith.constant 0 : index
    %3 = vector.load %arg7[%c1, %c0_5] : memref<2x128xf32, #tpu.memory_space<vmem>>, vector<1x128xf32>
    %c0_6 = arith.constant 0 : index
    %c0_7 = arith.constant 0 : index
    %4 = vector.load %arg8[%c0_6, %c0_7] : memref<2x32xf32, #tpu.memory_space<vmem>>, vector<1x32xf32>
    %c1_8 = arith.constant 1 : index
    %c0_9 = arith.constant 0 : index
    %5 = vector.load %arg8[%c1_8, %c0_9] : memref<2x32xf32, #tpu.memory_space<vmem>>, vector<1x32xf32>
    %6 = tpu.iota {dimensions = array<i32: 0>} : vector<98x2xi32>
    %7 = tpu.iota {dimensions = array<i32: 1>} : vector<98x2xi32>
    %c49_i32 = arith.constant 49 : i32
    %8 = vector.broadcast %c49_i32 : i32 to vector<98x2xi32>
    %9 = arith.muli %7, %8 : vector<98x2xi32>
    %10 = arith.cmpi sge, %6, %9 : vector<98x2xi32>
    %c1_i32 = arith.constant 1 : i32
    %11 = vector.broadcast %c1_i32 : i32 to vector<98x2xi32>
    %12 = arith.addi %7, %11 : vector<98x2xi32>
    %c49_i32_10 = arith.constant 49 : i32
    %13 = vector.broadcast %c49_i32_10 : i32 to vector<98x2xi32>
    %14 = arith.muli %12, %13 : vector<98x2xi32>
    %15 = arith.cmpi slt, %6, %14 : vector<98x2xi32>
    %16 = arith.andi %10, %15 : vector<98x2xi1>
    %17 = arith.extui %16 : vector<98x2xi1> to vector<98x2xi32>
    %18 = arith.sitofp %17 : vector<98x2xi32> to vector<98x2xf32>
    %19 = tpu.iota {dimensions = array<i32: 1>} : vector<2x98xi32>
    %20 = tpu.iota {dimensions = array<i32: 0>} : vector<2x98xi32>
    %c49_i32_11 = arith.constant 49 : i32
    %21 = vector.broadcast %c49_i32_11 : i32 to vector<2x98xi32>
    %22 = arith.muli %20, %21 : vector<2x98xi32>
    %23 = arith.cmpi sge, %19, %22 : vector<2x98xi32>
    %c1_i32_12 = arith.constant 1 : i32
    %24 = vector.broadcast %c1_i32_12 : i32 to vector<2x98xi32>
    %25 = arith.addi %20, %24 : vector<2x98xi32>
    %c49_i32_13 = arith.constant 49 : i32
    %26 = vector.broadcast %c49_i32_13 : i32 to vector<2x98xi32>
    %27 = arith.muli %25, %26 : vector<2x98xi32>
    %28 = arith.cmpi slt, %19, %27 : vector<2x98xi32>
    %29 = arith.andi %23, %28 : vector<2x98xi1>
    %cst = arith.constant 0.0204081628 : f32
    %cst_14 = arith.constant 0.000000e+00 : f32
    %30 = vector.broadcast %cst : f32 to vector<2x98xf32>
    %31 = vector.broadcast %cst_14 : f32 to vector<2x98xf32>
    %32 = arith.select %29, %30, %31 : vector<2x98xi1>, vector<2x98xf32>
    %c0_15 = arith.constant 0 : index
    %c0_16 = arith.constant 0 : index
    %33 = vector.load %arg2[%c0_15, %c0_16] : memref<96x128xf32, #tpu.memory_space<vmem>>, vector<96x128xf32>
    %cst_17 = arith.constant dense<0.000000e+00> : vector<98x128xf32>
    %34 = tpu.matmul %0, %33, %cst_17 {dimension_numbers = #tpu.dot_dimension_numbers<[1], [0], [0], [1], [0, 0, 1, 1], [], []>} : vector<98x96xf32>, vector<96x128xf32>, vector<98x128xf32> -> vector<98x128xf32>
    %35 = vector.broadcast %2 : vector<1x128xf32> to vector<98x128xf32>
    %36 = arith.addf %34, %35 : vector<98x128xf32>
    %cst_18 = arith.constant dense<0.000000e+00> : vector<2x128xf32>
    %37 = tpu.matmul %32, %36, %cst_18 {dimension_numbers = #tpu.dot_dimension_numbers<[1], [0], [0], [1], [0, 0, 1, 1], [], []>} : vector<2x98xf32>, vector<98x128xf32>, vector<2x128xf32> -> vector<2x128xf32>
    %38 = arith.addf %37, %1 : vector<2x128xf32>
    %c0_19 = arith.constant 0 : index
    %c0_20 = arith.constant 0 : index
    %39 = vector.load %arg4[%c0_19, %c0_20] : memref<128x32xf32, #tpu.memory_space<vmem>>, vector<128x32xf32>
    %cst_21 = arith.constant dense<0.000000e+00> : vector<2x32xf32>
    %40 = tpu.matmul %38, %39, %cst_21 {dimension_numbers = #tpu.dot_dimension_numbers<[1], [0], [0], [1], [0, 0, 1, 1], [], []>} : vector<2x128xf32>, vector<128x32xf32>, vector<2x32xf32> -> vector<2x32xf32>
    %41 = vector.broadcast %5 : vector<1x32xf32> to vector<2x32xf32>
    %42 = arith.addf %40, %41 : vector<2x32xf32>
    %cst_22 = arith.constant 0.000000e+00 : f32
    %43 = vector.broadcast %cst_22 : f32 to vector<2x32xf32>
    %44 = arith.maximumf %42, %43 : vector<2x32xf32>
    %c0_23 = arith.constant 0 : index
    %c0_24 = arith.constant 0 : index
    %45 = vector.load %arg6[%c0_23, %c0_24] : memref<32x128xf32, #tpu.memory_space<vmem>>, vector<32x128xf32>
    %cst_25 = arith.constant dense<0.000000e+00> : vector<2x128xf32>
    %46 = tpu.matmul %44, %45, %cst_25 {dimension_numbers = #tpu.dot_dimension_numbers<[1], [0], [0], [1], [0, 0, 1, 1], [], []>} : vector<2x32xf32>, vector<32x128xf32>, vector<2x128xf32> -> vector<2x128xf32>
    %47 = vector.broadcast %3 : vector<1x128xf32> to vector<2x128xf32>
    %48 = arith.addf %46, %47 : vector<2x128xf32>
    %c0_26 = arith.constant 0 : index
    %c0_27 = arith.constant 0 : index
    %49 = vector.load %arg3[%c0_26, %c0_27] : memref<128x32xf32, #tpu.memory_space<vmem>>, vector<128x32xf32>
    %cst_28 = arith.constant dense<0.000000e+00> : vector<2x32xf32>
    %50 = tpu.matmul %1, %49, %cst_28 {dimension_numbers = #tpu.dot_dimension_numbers<[1], [0], [0], [1], [0, 0, 1, 1], [], []>} : vector<2x128xf32>, vector<128x32xf32>, vector<2x32xf32> -> vector<2x32xf32>
    %51 = vector.broadcast %4 : vector<1x32xf32> to vector<2x32xf32>
    %52 = arith.addf %50, %51 : vector<2x32xf32>
    %c0_29 = arith.constant 0 : index
    %c0_30 = arith.constant 0 : index
    %53 = vector.load %arg3[%c0_29, %c0_30] : memref<128x32xf32, #tpu.memory_space<vmem>>, vector<128x32xf32>
    %cst_31 = arith.constant dense<0.000000e+00> : vector<98x32xf32>
    %54 = tpu.matmul %36, %53, %cst_31 {dimension_numbers = #tpu.dot_dimension_numbers<[1], [0], [0], [1], [0, 0, 1, 1], [], []>} : vector<98x128xf32>, vector<128x32xf32>, vector<98x32xf32> -> vector<98x32xf32>
    %cst_32 = arith.constant dense<0.000000e+00> : vector<98x32xf32>
    %55 = tpu.matmul %18, %52, %cst_32 {dimension_numbers = #tpu.dot_dimension_numbers<[1], [0], [0], [1], [0, 0, 1, 1], [], []>} : vector<98x2xf32>, vector<2x32xf32>, vector<98x32xf32> -> vector<98x32xf32>
    %56 = arith.addf %54, %55 : vector<98x32xf32>
    %cst_33 = arith.constant 0.000000e+00 : f32
    %57 = vector.broadcast %cst_33 : f32 to vector<98x32xf32>
    %58 = arith.maximumf %56, %57 : vector<98x32xf32>
    %c0_34 = arith.constant 0 : index
    %c0_35 = arith.constant 0 : index
    %59 = vector.load %arg5[%c0_34, %c0_35] : memref<32x128xf32, #tpu.memory_space<vmem>>, vector<32x128xf32>
    %cst_36 = arith.constant dense<0.000000e+00> : vector<98x128xf32>
    %60 = tpu.matmul %58, %59, %cst_36 {dimension_numbers = #tpu.dot_dimension_numbers<[1], [0], [0], [1], [0, 0, 1, 1], [], []>} : vector<98x32xf32>, vector<32x128xf32>, vector<98x128xf32> -> vector<98x128xf32>
    %cst_37 = arith.constant dense<0.000000e+00> : vector<98x128xf32>
    %61 = tpu.matmul %18, %48, %cst_37 {dimension_numbers = #tpu.dot_dimension_numbers<[1], [0], [0], [1], [0, 0, 1, 1], [], []>} : vector<98x2xf32>, vector<2x128xf32>, vector<98x128xf32> -> vector<98x128xf32>
    %62 = arith.addf %60, %61 : vector<98x128xf32>
    %63 = arith.negf %62 : vector<98x128xf32>
    %64 = math.exp %63 : vector<98x128xf32>
    %cst_38 = arith.constant 1.000000e+00 : f32
    %65 = vector.broadcast %cst_38 : f32 to vector<98x128xf32>
    %66 = arith.addf %65, %64 : vector<98x128xf32>
    %67 = arith.divf %65, %66 : vector<98x128xf32>
    %68 = arith.mulf %36, %67 : vector<98x128xf32>
    %cst_39 = arith.constant dense<0.000000e+00> : vector<2x128xf32>
    %69 = tpu.matmul %32, %68, %cst_39 {dimension_numbers = #tpu.dot_dimension_numbers<[1], [0], [0], [1], [0, 0, 1, 1], [], []>} : vector<2x98xf32>, vector<98x128xf32>, vector<2x128xf32> -> vector<2x128xf32>
    %cst_40 = arith.constant dense<0.000000e+00> : vector<2x128xf32>
    %70 = tpu.matmul %32, %67, %cst_40 {dimension_numbers = #tpu.dot_dimension_numbers<[1], [0], [0], [1], [0, 0, 1, 1], [], []>} : vector<2x98xf32>, vector<98x128xf32>, vector<2x128xf32> -> vector<2x128xf32>
    %cst_41 = arith.constant 1.000000e+00 : f32
    %71 = vector.broadcast %cst_41 : f32 to vector<2x128xf32>
    %72 = arith.subf %71, %70 : vector<2x128xf32>
    %73 = arith.mulf %1, %72 : vector<2x128xf32>
    %74 = arith.addf %69, %73 : vector<2x128xf32>
    %cst_42 = arith.constant 2.000000e+00 : f32
    %75 = vector.broadcast %cst_42 : f32 to vector<2x128xf32>
    %76 = arith.mulf %75, %74 : vector<2x128xf32>
    %cst_43 = arith.constant 5.000000e-01 : f32
    %77 = vector.broadcast %cst_43 : f32 to vector<2x128xf32>
    %78 = arith.mulf %77, %76 : vector<2x128xf32>
    %cst_44 = arith.constant 0.707106769 : f32
    %79 = vector.broadcast %cst_44 : f32 to vector<2x128xf32>
    %80 = arith.mulf %76, %79 : vector<2x128xf32>
    %81 = math.erf %80 : vector<2x128xf32>
    %cst_45 = arith.constant 1.000000e+00 : f32
    %82 = vector.broadcast %cst_45 : f32 to vector<2x128xf32>
    %83 = arith.addf %82, %81 : vector<2x128xf32>
    %84 = arith.mulf %78, %83 : vector<2x128xf32>
    %c0_46 = arith.constant 0 : index
    %85 = memref.load %arg9[%c0_46] : memref<1xf32, #tpu.memory_space<smem>>
    %86 = vector.broadcast %85 : f32 to vector<2x128xf32>
    %87 = arith.mulf %86, %84 : vector<2x128xf32>
    %cst_47 = arith.constant 1.000000e+00 : f32
    %88 = arith.subf %cst_47, %85 : f32
    %89 = vector.broadcast %88 : f32 to vector<2x128xf32>
    %90 = arith.mulf %89, %1 : vector<2x128xf32>
    %91 = arith.addf %87, %90 : vector<2x128xf32>
    %c0_48 = arith.constant 0 : index
    %c0_49 = arith.constant 0 : index
    %92 = vector.load %arg10[%c0_48, %c0_49] : memref<2x128xf32, #tpu.memory_space<vmem>>, vector<2x128xf32>
    tpu.vector_store %arg10[%c0_48, %c0_49], %91 {strides = array<i32>} : memref<2x128xf32, #tpu.memory_space<vmem>>, vector<2x128xf32>,
    return
  }
}

</mosaic_0001>

<llo_original>
// kernel: tpu_custom_call.1
$region0: #{tpu_custom_call.1}
  #allocation0 [shape = 'u32[]', space=smem, size = 0x4, offset = 0x4, fixed_abs, tag = 'smem constant byte address 0x4 - core index']
  #allocation1 [shape = 'u32[144,128]{1,0:T(1,128)}', space=vmem, size = 0x12000, scoped, tag = 'internal scratch']
  #allocation2 [shape = 'f32[1]{0:T(128)S(6)}', space=smem, size = 0x200, scoped, tag = 'scoped memory for tpu_custom_call.1']
  %s0 = inlined_call_operand.vmem [shape: f32[98,96], index: 0, kind: input, shape index: {}]
  %s1 = inlined_call_operand.vmem [shape: f32[2,128], index: 1, kind: input, shape index: {}]
  %s2 = inlined_call_operand.vmem [shape: f32[96,128], index: 2, kind: input, shape index: {}]
  %s3 = inlined_call_operand.vmem [shape: f32[128,32], index: 3, kind: input, shape index: {}]
  %s4 = inlined_call_operand.vmem [shape: f32[128,32], index: 4, kind: input, shape index: {}]
  %s5 = inlined_call_operand.vmem [shape: f32[32,128], index: 5, kind: input, shape index: {}]
  %s6 = inlined_call_operand.vmem [shape: f32[32,128], index: 6, kind: input, shape index: {}]
  %s7 = inlined_call_operand.vmem [shape: f32[2,128], index: 7, kind: input, shape index: {}]
  %s8 = inlined_call_operand.vmem [shape: f32[2,32], index: 8, kind: input, shape index: {}]
  %s9 = inlined_call_operand.<no memory space> [shape: f32[1], index: 9, kind: input, shape index: {}]
  %s10 = inlined_call_operand.hbm [shape: f32[2,128], index: 10, kind: output, shape index: {}]
  %s11 = sld [smem:[#allocation0]]
  $region50: #{tpu_custom_call.1} parent=0
    _
  %s13 = ssub.s32 1, %s11
  %s14 = scalar_select 0, %s13, %s11
  %15 = sst [smem:[#allocation2]] %s9
  $region1: #{tpu_custom_call.1} parent=0
    #allocation3 [shape = 'u8[1024]{0}', space=vmem, size = 0x400, scoped, tag = 'output window, operand 0, single buffered']
    #allocation4 [shape = 's32[1]{0}', space=sflag, size = 0x4, scoped, tag = 'scoped memory for tpu_custom_call.1']
    %16 = vsyncpa [#allocation4], 0
    // Predicated region
    $region2: #{tpu_custom_call.1} parent=1 // pred_check
      _
    $region3: #{tpu_custom_call.1} parent=1 // pred_check_branch
      %18 = sbr.rel (0) target = $region5
    $region4: #{tpu_custom_call.1} parent=1 // pred_region
      _
    $region5: #{tpu_custom_call.1} parent=1 // pred_fallthru
      _
    // Predicated region
    $region6: #{tpu_custom_call.1} parent=1 // pred_check
      _
    $region7: #{tpu_custom_call.1} parent=1 // pred_check_branch
      %20 = sbr.rel (0) target = $region9
    $region8: #{tpu_custom_call.1} parent=1 // pred_region
      _
    $region9: #{tpu_custom_call.1} parent=1 // pred_fallthru
      _
    // Predicated region
    $region10: #{tpu_custom_call.1} parent=1 // pred_check
      _
    $region11: #{tpu_custom_call.1} parent=1 // pred_check_branch
      %22 = sbr.rel (0) target = $region13
    $region12: #{tpu_custom_call.1} parent=1 // pred_region
      _
    $region13: #{tpu_custom_call.1} parent=1 // pred_fallthru
      _
    // Predicated region
    $region14: #{tpu_custom_call.1} parent=1 // pred_check
      _
    $region15: #{tpu_custom_call.1} parent=1 // pred_check_branch
      %24 = sbr.rel (0) target = $region17
    $region16: #{tpu_custom_call.1} parent=1 // pred_region
      _
    $region17: #{tpu_custom_call.1} parent=1 // pred_fallthru
      _
    // Predicated region
    $region18: #{tpu_custom_call.1} parent=1 // pred_check
      _
    $region19: #{tpu_custom_call.1} parent=1 // pred_check_branch
      %26 = sbr.rel (0) target = $region21
    $region20: #{tpu_custom_call.1} parent=1 // pred_region
      _
    $region21: #{tpu_custom_call.1} parent=1 // pred_fallthru
      _
    // Predicated region
    $region22: #{tpu_custom_call.1} parent=1 // pred_check
      _
    $region23: #{tpu_custom_call.1} parent=1 // pred_check_branch
      %28 = sbr.rel (0) target = $region25
    $region24: #{tpu_custom_call.1} parent=1 // pred_region
      _
    $region25: #{tpu_custom_call.1} parent=1 // pred_fallthru
      _
    // Predicated region
    $region26: #{tpu_custom_call.1} parent=1 // pred_check
      _
    $region27: #{tpu_custom_call.1} parent=1 // pred_check_branch
      %30 = sbr.rel (0) target = $region29
    $region28: #{tpu_custom_call.1} parent=1 // pred_region
      _
    $region29: #{tpu_custom_call.1} parent=1 // pred_fallthru
      _
    // Predicated region
    $region30: #{tpu_custom_call.1} parent=1 // pred_check
      _
    $region31: #{tpu_custom_call.1} parent=1 // pred_check_branch
      %32 = sbr.rel (0) target = $region33
    $region32: #{tpu_custom_call.1} parent=1 // pred_region
      _
    $region33: #{tpu_custom_call.1} parent=1 // pred_fallthru
      _
    // Predicated region
    $region34: #{tpu_custom_call.1} parent=1 // pred_check
      _
    $region35: #{tpu_custom_call.1} parent=1 // pred_check_branch
      %34 = sbr.rel (0) target = $region37
    $region36: #{tpu_custom_call.1} parent=1 // pred_region
      _
    $region37: #{tpu_custom_call.1} parent=1 // pred_fallthru
      _
    // Predicated region
    $region38: #{tpu_custom_call.1} parent=1 // pred_check
      _
    $region39: #{tpu_custom_call.1} parent=1 // pred_check_branch
      %36 = sbr.rel (0) target = $region41
    $region40: #{tpu_custom_call.1} parent=1 // pred_region
      _
    $region41: #{tpu_custom_call.1} parent=1 // pred_fallthru
      _
    %v37 = vld [vmem:[%s0] sm:$0xff]
    %v38 = vld [vmem:[%s0 + $0x8] sm:$0xff]
    %v39 = vld [vmem:[%s0 + $0x10] sm:$0xff]
    %v40 = vld [vmem:[%s0 + $0x18] sm:$0xff]
    %v41 = vld [vmem:[%s0 + $0x20] sm:$0xff]
    %v42 = vld [vmem:[%s0 + $0x28] sm:$0xff]
    %v43 = vld [vmem:[%s0 + $0x30] sm:$0xff]
    %v44 = vld [vmem:[%s0 + $0x38] sm:$0xff]
    %v45 = vld [vmem:[%s0 + $0x40] sm:$0xff]
    %v46 = vld [vmem:[%s0 + $0x48] sm:$0xff]
    %v47 = vld [vmem:[%s0 + $0x50] sm:$0xff]
    %v48 = vld [vmem:[%s0 + $0x58] sm:$0xff]
    %v49 = vld [vmem:[%s0 + $0x60] sm:$0x3]
    %v50 = vld [vmem:[%s1] sm:$0x3]
    %v51 = vld [vmem:[%s7] sm:$0x1]
    %v52 = vld [vmem:[%s7 + $0x1] sm:$0x1]
    %v53 = vld [vmem:[%s8] sm:$0x1]
    %v54 = vld [vmem:[%s8 + $0x1] sm:$0x1]
    %v55 = vlaneseq
    %v56 = vshrl.u32 %v55, 7
    %v57 = vadd.s32 %v56, 8
    %v58 = vadd.s32 %v56, 16
    %v59 = vadd.s32 %v56, 24
    %v60 = vadd.s32 %v56, 32
    %v61 = vadd.s32 %v56, 40
    %v62 = vadd.s32 %v56, 48
    %v63 = vadd.s32 %v56, 56
    %v64 = vadd.s32 %v56, 64
    %v65 = vadd.s32 %v56, 72
    %v66 = vadd.s32 %v56, 80
    %v67 = vadd.s32 %v56, 88
    %v68 = vadd.s32 %v56, 96
    %v69 = vlaneseq
    %v70 = vand.u32 %v69, 127
    %v71 = vmul.u32 %v70, 49
    %vm72 = vcmp.ge.s32.totalorder %v56, %v71
    %vm73 = vcmp.ge.s32.totalorder %v57, %v71
    %vm74 = vcmp.ge.s32.totalorder %v58, %v71
    %vm75 = vcmp.ge.s32.totalorder %v59, %v71
    %vm76 = vcmp.ge.s32.totalorder %v60, %v71
    %vm77 = vcmp.ge.s32.totalorder %v61, %v71
    %vm78 = vcmp.ge.s32.totalorder %v62, %v71
    %vm79 = vcmp.ge.s32.totalorder %v63, %v71
    %vm80 = vcmp.ge.s32.totalorder %v64, %v71
    %vm81 = vcmp.ge.s32.totalorder %v65, %v71
    %vm82 = vcmp.ge.s32.totalorder %v66, %v71
    %vm83 = vcmp.ge.s32.totalorder %v67, %v71
    %vm84 = vcmp.ge.s32.totalorder %v68, %v71
    %v85 = vadd.s32 %v70, 1
    %v86 = vmul.u32 %v85, 49
    %vm87 = vcmp.lt.s32.totalorder %v56, %v86
    %vm88 = vcmp.lt.s32.totalorder %v57, %v86
    %vm89 = vcmp.lt.s32.totalorder %v58, %v86
    %vm90 = vcmp.lt.s32.totalorder %v59, %v86
    %vm91 = vcmp.lt.s32.totalorder %v60, %v86
    %vm92 = vcmp.lt.s32.totalorder %v61, %v86
    %vm93 = vcmp.lt.s32.totalorder %v62, %v86
    %vm94 = vcmp.lt.s32.totalorder %v63, %v86
    %vm95 = vcmp.lt.s32.totalorder %v64, %v86
    %vm96 = vcmp.lt.s32.totalorder %v65, %v86
    %vm97 = vcmp.lt.s32.totalorder %v66, %v86
    %vm98 = vcmp.lt.s32.totalorder %v67, %v86
    %vm99 = vcmp.lt.s32.totalorder %v68, %v86
    %vm100 = vmand %vm72, %vm87
    %vm101 = vmand %vm73, %vm88
    %vm102 = vmand %vm74, %vm89
    %vm103 = vmand %vm75, %vm90
    %vm104 = vmand %vm76, %vm91
    %vm105 = vmand %vm77, %vm92
    %vm106 = vmand %vm78, %vm93
    %vm107 = vmand %vm79, %vm94
    %vm108 = vmand %vm80, %vm95
    %vm109 = vmand %vm81, %vm96
    %vm110 = vmand %vm82, %vm97
    %vm111 = vmand %vm83, %vm98
    %vm112 = vmand %vm84, %vm99
    %v113 = vsel %vm100, 1, 0
    %v114 = vsel %vm101, 1, 0
    %v115 = vsel %vm102, 1, 0
    %v116 = vsel %vm103, 1, 0
    %v117 = vsel %vm104, 1, 0
    %v118 = vsel %vm105, 1, 0
    %v119 = vsel %vm106, 1, 0
    %v120 = vsel %vm107, 1, 0
    %v121 = vsel %vm108, 1, 0
    %v122 = vsel %vm109, 1, 0
    %v123 = vsel %vm110, 1, 0
    %v124 = vsel %vm111, 1, 0
    %v125 = vsel %vm112, 1, 0
    %v126 = vcvt.s32.f32 %v113
    %v127 = vcvt.s32.f32 %v114
    %v128 = vcvt.s32.f32 %v115
    %v129 = vcvt.s32.f32 %v116
    %v130 = vcvt.s32.f32 %v117
    %v131 = vcvt.s32.f32 %v118
    %v132 = vcvt.s32.f32 %v119
    %v133 = vcvt.s32.f32 %v120
    %v134 = vcvt.s32.f32 %v121
    %v135 = vcvt.s32.f32 %v122
    %v136 = vcvt.s32.f32 %v123
    %v137 = vcvt.s32.f32 %v124
    %v138 = vcvt.s32.f32 %v125
    %v139 = vmul.u32 %v56, 49
    %vm140 = vcmp.ge.s32.totalorder %v70, %v139
    %v141 = vadd.s32 %v56, 1
    %v142 = vmul.u32 %v141, 49
    %vm143 = vcmp.lt.s32.totalorder %v70, %v142
    %vm144 = vmand %vm140, %vm143
    %v145 = vsel %vm144, 0.020408163, 0.0
    %v146 = vld [vmem:[%s2] sm:$0xff]
    %v147 = vld [vmem:[%s2 + $0x8] sm:$0xff]
    %v148 = vld [vmem:[%s2 + $0x10] sm:$0xff]
    %v149 = vld [vmem:[%s2 + $0x18] sm:$0xff]
    %v150 = vld [vmem:[%s2 + $0x20] sm:$0xff]
    %v151 = vld [vmem:[%s2 + $0x28] sm:$0xff]
    %v152 = vld [vmem:[%s2 + $0x30] sm:$0xff]
    %v153 = vld [vmem:[%s2 + $0x38] sm:$0xff]
    %v154 = vld [vmem:[%s2 + $0x40] sm:$0xff]
    %v155 = vld [vmem:[%s2 + $0x48] sm:$0xff]
    %v156 = vld [vmem:[%s2 + $0x50] sm:$0xff]
    %v157 = vld [vmem:[%s2 + $0x58] sm:$0xff]
    %v158 = vlaneseq
    %v159 = vshrl.u32 %v158, 7
    %v160 = vsub.s32 0, %v159
    %v161 = vrot.slane %v51, %v160
    %vm162 = vcmask 785408
    %v164 = vsel %vm162, %v37, 0
    %v167 = vsel %vm162, %v38, 0
    %v170 = vsel %vm162, %v39, 0
    %v173 = vsel %vm162, %v40, 0
    %v176 = vsel %vm162, %v41, 0
    %v179 = vsel %vm162, %v42, 0
    %v182 = vsel %vm162, %v43, 0
    %v185 = vsel %vm162, %v44, 0
    %v188 = vsel %vm162, %v45, 0
    %v191 = vsel %vm162, %v46, 0
    %v194 = vsel %vm162, %v47, 0
    %v197 = vsel %vm162, %v48, 0
    %v200 = vsel %vm162, %v49, 0
    %202 = vmatprep.subr.mxu0 0.0
    %203 = vmatpush1.msra.mxu0 %v146
    %204 = vmatprep.subr.mxu0 0.0
    %205 = vmatpush1.msra.mxu0 %v147
    %206 = vmatprep.subr.mxu0 0.0
    %207 = vmatpush1.msra.mxu0 %v148
    %208 = vmatprep.subr.mxu0 0.0
    %209 = vmatpush1.msra.mxu0 %v149
    %210 = vmatprep.subr.mxu0 0.0
    %211 = vmatpush1.msra.mxu0 %v150
    %212 = vmatprep.subr.mxu0 0.0
    %213 = vmatpush1.msra.mxu0 %v151
    %214 = vmatprep.subr.mxu0 0.0
    %215 = vmatpush1.msra.mxu0 %v152
    %216 = vmatprep.subr.mxu0 0.0
    %217 = vmatpush1.msra.mxu0 %v153
    %218 = vmatprep.subr.mxu0 0.0
    %219 = vmatpush1.msra.mxu0 %v154
    %220 = vmatprep.subr.mxu0 0.0
    %221 = vmatpush1.msra.mxu0 %v155
    %222 = vmatprep.subr.mxu0 0.0
    %223 = vmatpush1.msra.mxu0 %v156
    %224 = vmatprep.subr.mxu0 0.0
    %225 = vmatpush1.msra.mxu0 %v157
    %226 = vmatprep.subr.mxu0 0.0
    %227 = vmatpush1.msra.mxu0 0.0
    %228 = vmatprep.subr.mxu0 0.0
    %229 = vmatpush1.msra.mxu0 0.0
    %230 = vmatprep.subr.mxu0 0.0
    %231 = vmatpush1.msra.mxu0 0.0
    %232 = vmatprep.subr.mxu0 0.0
    %233 = vmatpush1.msra.mxu0 0.0
    %234 = vmatprep.subr.mxu0 0.0
    %235 = vmatpush1.msra.mxu0 0.0
    %236 = vmatprep.subr.mxu0 0.0
    %237 = vmatpush1.msra.mxu0 0.0
    %238 = vmatprep.subr.mxu0 0.0
    %239 = vmatpush1.msra.mxu0 0.0
    %240 = vmatprep.subr.mxu0 0.0
    %241 = vmatpush1.msra.mxu0 0.0
    %242 = vmatprep.subr.mxu0 0.0
    %243 = vmatpush1.msra.mxu0 0.0
    %244 = vmatprep.subr.mxu0 0.0
    %245 = vmatpush1.msra.mxu0 0.0
    %246 = vmatprep.subr.mxu0 0.0
    %247 = vmatpush1.msra.mxu0 0.0
    %248 = vmatprep.subr.mxu0 0.0
    %249 = vmatpush1.msra.mxu0 0.0
    %250 = vmatprep.subr.mxu0 0.0
    %251 = vmatpush1.msra.mxu0 0.0
    %252 = vmatprep.subr.mxu0 0.0
    %253 = vmatpush1.msra.mxu0 0.0
    %254 = vmatprep.subr.mxu0 0.0
    %255 = vmatpush1.msra.mxu0 0.0
    %256 = vmatprep.subr.mxu0 0.0
    %257 = vmatpush1.msra.mxu0 0.0
    %258 = vmatprep.subr.mxu0 0.0
    %259 = vmatpush1.msra.mxu0 0.0
    %260 = vmatprep.subr.mxu0 0.0
    %261 = vmatpush1.msra.mxu0 0.0
    %262 = vmatprep.subr.mxu0 0.0
    %263 = vmatpush1.msra.mxu0 0.0
    %264 = vmatprep.subr.mxu0 0.0
    %265 = vmatpush1.msra.mxu0 0.0
    %266 = vmatprep.mubr.f32.mxu0 0.0
    %267 = vmatmul.mubr.f32.gmra.mrb[0].mxu0 %v164
    %v268 = vpop.f32.mrb[0].mxu0
    %v269 = vadd.f32 %v161, %v268
    %v270 = vpop.f32.mrb[0].mxu0
    %271 = vmatprep.mubr.f32.mxu0 0.0
    %272 = vmatmul.mubr.f32.gmra.mrb[0].mxu0 %v167
    %v273 = vpop.f32.mrb[0].mxu0
    %v274 = vadd.f32 %v161, %v273
    %v275 = vpop.f32.mrb[0].mxu0
    %276 = vmatprep.mubr.f32.mxu0 0.0
    %277 = vmatmul.mubr.f32.gmra.mrb[0].mxu0 %v170
    %v278 = vpop.f32.mrb[0].mxu0
    %v279 = vadd.f32 %v161, %v278
    %v280 = vpop.f32.mrb[0].mxu0
    %281 = vmatprep.mubr.f32.mxu0 0.0
    %282 = vmatmul.mubr.f32.gmra.mrb[0].mxu0 %v173
    %v283 = vpop.f32.mrb[0].mxu0
    %v284 = vadd.f32 %v161, %v283
    %v285 = vpop.f32.mrb[0].mxu0
    %286 = vmatprep.mubr.f32.mxu0 0.0
    %287 = vmatmul.mubr.f32.gmra.mrb[0].mxu0 %v176
    %v288 = vpop.f32.mrb[0].mxu0
    %v289 = vadd.f32 %v161, %v288
    %v290 = vpop.f32.mrb[0].mxu0
    %291 = vmatprep.mubr.f32.mxu0 0.0
    %292 = vmatmul.mubr.f32.gmra.mrb[0].mxu0 %v179
    %v293 = vpop.f32.mrb[0].mxu0
    %v294 = vadd.f32 %v161, %v293
    %v295 = vpop.f32.mrb[0].mxu0
    %296 = vmatprep.mubr.f32.mxu0 0.0
    %297 = vmatmul.mubr.f32.gmra.mrb[0].mxu0 %v182
    %v298 = vpop.f32.mrb[0].mxu0
    %v299 = vadd.f32 %v161, %v298
    %v300 = vpop.f32.mrb[0].mxu0
    %301 = vmatprep.mubr.f32.mxu0 0.0
    %302 = vmatmul.mubr.f32.gmra.mrb[0].mxu0 %v185
    %v303 = vpop.f32.mrb[0].mxu0
    %v304 = vadd.f32 %v161, %v303
    %v305 = vpop.f32.mrb[0].mxu0
    %306 = vmatprep.mubr.f32.mxu0 0.0
    %307 = vmatmul.mubr.f32.gmra.mrb[0].mxu0 %v188
    %v308 = vpop.f32.mrb[0].mxu0
    %v309 = vadd.f32 %v161, %v308
    %v310 = vpop.f32.mrb[0].mxu0
    %311 = vmatprep.mubr.f32.mxu0 0.0
    %312 = vmatmul.mubr.f32.gmra.mrb[0].mxu0 %v191
    %v313 = vpop.f32.mrb[0].mxu0
    %v314 = vadd.f32 %v161, %v313
    %v315 = vpop.f32.mrb[0].mxu0
    %316 = vmatprep.mubr.f32.mxu0 0.0
    %317 = vmatmul.mubr.f32.gmra.mrb[0].mxu0 %v194
    %v318 = vpop.f32.mrb[0].mxu0
    %v319 = vadd.f32 %v161, %v318
    %v320 = vpop.f32.mrb[0].mxu0
    %321 = vmatprep.mubr.f32.mxu0 0.0
    %322 = vmatmul.mubr.f32.gmra.mrb[0].mxu0 %v197
    %v323 = vpop.f32.mrb[0].mxu0
    %v324 = vadd.f32 %v161, %v323
    %v325 = vpop.f32.mrb[0].mxu0
    %326 = vmatprep.mubr.f32.mxu0 0.0
    %327 = vmatmul.mubr.f32.gmra.mrb[0].mxu0 %v200
    %v328 = vpop.f32.mrb[0].mxu0
    %v329 = vadd.f32 %v161, %v328
    %v330 = vpop.f32.mrb[0].mxu0
    %331 = vdwg.mxu0
    %vm332 = vcmask 801792
    %v334 = vsel %vm332, %v145, 0
    %vm336 = vcmask 1041408
    %v338 = vsel %vm336, %v329, 0
    %340 = vmatprep.subr.mxu0 0.0
    %341 = vmatpush1.msra.mxu0 %v269
    %342 = vmatprep.subr.mxu0 0.0
    %343 = vmatpush1.msra.mxu0 %v274
    %344 = vmatprep.subr.mxu0 0.0
    %345 = vmatpush1.msra.mxu0 %v279
    %346 = vmatprep.subr.mxu0 0.0
    %347 = vmatpush1.msra.mxu0 %v284
    %348 = vmatprep.subr.mxu0 0.0
    %349 = vmatpush1.msra.mxu0 %v289
    %350 = vmatprep.subr.mxu0 0.0
    %351 = vmatpush1.msra.mxu0 %v294
    %352 = vmatprep.subr.mxu0 0.0
    %353 = vmatpush1.msra.mxu0 %v299
    %354 = vmatprep.subr.mxu0 0.0
    %355 = vmatpush1.msra.mxu0 %v304
    %356 = vmatprep.subr.mxu0 0.0
    %357 = vmatpush1.msra.mxu0 %v309
    %358 = vmatprep.subr.mxu0 0.0
    %359 = vmatpush1.msra.mxu0 %v314
    %360 = vmatprep.subr.mxu0 0.0
    %361 = vmatpush1.msra.mxu0 %v319
    %362 = vmatprep.subr.mxu0 0.0
    %363 = vmatpush1.msra.mxu0 %v324
    %364 = vmatprep.subr.mxu0 0.0
    %365 = vmatpush1.msra.mxu0 %v338
    %366 = vmatprep.subr.mxu0 0.0
    %367 = vmatpush1.msra.mxu0 0.0
    %368 = vmatprep.subr.mxu0 0.0
    %369 = vmatpush1.msra.mxu0 0.0
    %370 = vmatprep.subr.mxu0 0.0
    %371 = vmatpush1.msra.mxu0 0.0
    %372 = vmatprep.subr.mxu0 0.0
    %373 = vmatpush1.msra.mxu0 0.0
    %374 = vmatprep.subr.mxu0 0.0
    %375 = vmatpush1.msra.mxu0 0.0
    %376 = vmatprep.subr.mxu0 0.0
    %377 = vmatpush1.msra.mxu0 0.0
    %378 = vmatprep.subr.mxu0 0.0
    %379 = vmatpush1.msra.mxu0 0.0
    %380 = vmatprep.subr.mxu0 0.0
    %381 = vmatpush1.msra.mxu0 0.0
    %382 = vmatprep.subr.mxu0 0.0
    %383 = vmatpush1.msra.mxu0 0.0
    %384 = vmatprep.subr.mxu0 0.0
    %385 = vmatpush1.msra.mxu0 0.0
    %386 = vmatprep.subr.mxu0 0.0
    %387 = vmatpush1.msra.mxu0 0.0
    %388 = vmatprep.subr.mxu0 0.0
    %389 = vmatpush1.msra.mxu0 0.0
    %390 = vmatprep.subr.mxu0 0.0
    %391 = vmatpush1.msra.mxu0 0.0
    %392 = vmatprep.subr.mxu0 0.0
    %393 = vmatpush1.msra.mxu0 0.0
    %394 = vmatprep.subr.mxu0 0.0
    %395 = vmatpush1.msra.mxu0 0.0
    %396 = vmatprep.subr.mxu0 0.0
    %397 = vmatpush1.msra.mxu0 0.0
    %398 = vmatprep.subr.mxu0 0.0
    %399 = vmatpush1.msra.mxu0 0.0
    %400 = vmatprep.subr.mxu0 0.0
    %401 = vmatpush1.msra.mxu0 0.0
    %402 = vmatprep.subr.mxu0 0.0
    %403 = vmatpush1.msra.mxu0 0.0
    %404 = vmatprep.mubr.f32.mxu0 0.0
    %405 = vmatmul.mubr.f32.gmra.mrb[0].mxu0 %v334
    %v406 = vpop.f32.mrb[0].mxu0
    %v407 = vadd.f32 %v50, %v406
    %v408 = vpop.f32.mrb[0].mxu0
    %409 = vdwg.mxu0
    %v410 = vld [vmem:[%s4] sm:$0xff]
    %v411 = vld [vmem:[%s4 + $0x8] sm:$0xff]
    %v412 = vld [vmem:[%s4 + $0x10] sm:$0xff]
    %v413 = vld [vmem:[%s4 + $0x18] sm:$0xff]
    %v414 = vld [vmem:[%s4 + $0x20] sm:$0xff]
    %v415 = vld [vmem:[%s4 + $0x28] sm:$0xff]
    %v416 = vld [vmem:[%s4 + $0x30] sm:$0xff]
    %v417 = vld [vmem:[%s4 + $0x38] sm:$0xff]
    %v418 = vld [vmem:[%s4 + $0x40] sm:$0xff]
    %v419 = vld [vmem:[%s4 + $0x48] sm:$0xff]
    %v420 = vld [vmem:[%s4 + $0x50] sm:$0xff]
    %v421 = vld [vmem:[%s4 + $0x58] sm:$0xff]
    %v422 = vld [vmem:[%s4 + $0x60] sm:$0xff]
    %v423 = vld [vmem:[%s4 + $0x68] sm:$0xff]
    %v424 = vld [vmem:[%s4 + $0x70] sm:$0xff]
    %v425 = vld [vmem:[%s4 + $0x78] sm:$0xff]
    %v426 = vlaneseq
    %v427 = vshrl.u32 %v426, 7
    %v428 = vsub.s32 0, %v427
    %v429 = vrot.slane %v54, %v428
    %430 = vmatprep.subr.mxu0 0.0
    %431 = vmatpush1.msra.mxu0 %v410
    %432 = vmatprep.subr.mxu0 0.0
    %433 = vmatpush1.msra.mxu0 %v411
    %434 = vmatprep.subr.mxu0 0.0
    %435 = vmatpush1.msra.mxu0 %v412
    %436 = vmatprep.subr.mxu0 0.0
    %437 = vmatpush1.msra.mxu0 %v413
    %438 = vmatprep.subr.mxu0 0.0
    %439 = vmatpush1.msra.mxu0 %v414
    %440 = vmatprep.subr.mxu0 0.0
    %441 = vmatpush1.msra.mxu0 %v415
    %442 = vmatprep.subr.mxu0 0.0
    %443 = vmatpush1.msra.mxu0 %v416
    %444 = vmatprep.subr.mxu0 0.0
    %445 = vmatpush1.msra.mxu0 %v417
    %446 = vmatprep.subr.mxu0 0.0
    %447 = vmatpush1.msra.mxu0 %v418
    %448 = vmatprep.subr.mxu0 0.0
    %449 = vmatpush1.msra.mxu0 %v419
    %450 = vmatprep.subr.mxu0 0.0
    %451 = vmatpush1.msra.mxu0 %v420
    %452 = vmatprep.subr.mxu0 0.0
    %453 = vmatpush1.msra.mxu0 %v421
    %454 = vmatprep.subr.mxu0 0.0
    %455 = vmatpush1.msra.mxu0 %v422
    %456 = vmatprep.subr.mxu0 0.0
    %457 = vmatpush1.msra.mxu0 %v423
    %458 = vmatprep.subr.mxu0 0.0
    %459 = vmatpush1.msra.mxu0 %v424
    %460 = vmatprep.subr.mxu0 0.0
    %461 = vmatpush1.msra.mxu0 %v425
    %462 = vmatprep.subr.mxu0 0.0
    %463 = vmatpush1.msra.mxu0 0.0
    %464 = vmatprep.subr.mxu0 0.0
    %465 = vmatpush1.msra.mxu0 0.0
    %466 = vmatprep.subr.mxu0 0.0
    %467 = vmatpush1.msra.mxu0 0.0
    %468 = vmatprep.subr.mxu0 0.0
    %469 = vmatpush1.msra.mxu0 0.0
    %470 = vmatprep.subr.mxu0 0.0
    %471 = vmatpush1.msra.mxu0 0.0
    %472 = vmatprep.subr.mxu0 0.0
    %473 = vmatpush1.msra.mxu0 0.0
    %474 = vmatprep.subr.mxu0 0.0
    %475 = vmatpush1.msra.mxu0 0.0
    %476 = vmatprep.subr.mxu0 0.0
    %477 = vmatpush1.msra.mxu0 0.0
    %478 = vmatprep.subr.mxu0 0.0
    %479 = vmatpush1.msra.mxu0 0.0
    %480 = vmatprep.subr.mxu0 0.0
    %481 = vmatpush1.msra.mxu0 0.0
    %482 = vmatprep.subr.mxu0 0.0
    %483 = vmatpush1.msra.mxu0 0.0
    %484 = vmatprep.subr.mxu0 0.0
    %485 = vmatpush1.msra.mxu0 0.0
    %486 = vmatprep.subr.mxu0 0.0
    %487 = vmatpush1.msra.mxu0 0.0
    %488 = vmatprep.subr.mxu0 0.0
    %489 = vmatpush1.msra.mxu0 0.0
    %490 = vmatprep.subr.mxu0 0.0
    %491 = vmatpush1.msra.mxu0 0.0
    %492 = vmatprep.subr.mxu0 0.0
    %493 = vmatpush1.msra.mxu0 0.0
    %494 = vmatprep.mubr.f32.mxu0 0.0
    %495 = vmatmul.mubr.f32.gmra.mrb[0].mxu0 %v407
    %v496 = vpop.f32.mrb[0].mxu0
    %v497 = vadd.f32 %v429, %v496
    %v498 = vpop.f32.mrb[0].mxu0
    %499 = vdwg.mxu0
    %v500 = vmax.f32 %v497, 0.0
    %v501 = vld [vmem:[%s6] sm:$0xff]
    %v502 = vld [vmem:[%s6 + $0x8] sm:$0xff]
    %v503 = vld [vmem:[%s6 + $0x10] sm:$0xff]
    %v504 = vld [vmem:[%s6 + $0x18] sm:$0xff]
    %v505 = vlaneseq
    %v506 = vshrl.u32 %v505, 7
    %v507 = vsub.s32 0, %v506
    %v508 = vrot.slane %v52, %v507
    %vm509 = vcmask 261120
    %v511 = vsel %vm509, %v500, 0
    %513 = vmatprep.subr.mxu0 0.0
    %514 = vmatpush1.msra.mxu0 %v501
    %515 = vmatprep.subr.mxu0 0.0
    %516 = vmatpush1.msra.mxu0 %v502
    %517 = vmatprep.subr.mxu0 0.0
    %518 = vmatpush1.msra.mxu0 %v503
    %519 = vmatprep.subr.mxu0 0.0
    %520 = vmatpush1.msra.mxu0 %v504
    %521 = vmatprep.subr.mxu0 0.0
    %522 = vmatpush1.msra.mxu0 0.0
    %523 = vmatprep.subr.mxu0 0.0
    %524 = vmatpush1.msra.mxu0 0.0
    %525 = vmatprep.subr.mxu0 0.0
    %526 = vmatpush1.msra.mxu0 0.0
    %527 = vmatprep.subr.mxu0 0.0
    %528 = vmatpush1.msra.mxu0 0.0
    %529 = vmatprep.subr.mxu0 0.0
    %530 = vmatpush1.msra.mxu0 0.0
    %531 = vmatprep.subr.mxu0 0.0
    %532 = vmatpush1.msra.mxu0 0.0
    %533 = vmatprep.subr.mxu0 0.0
    %534 = vmatpush1.msra.mxu0 0.0
    %535 = vmatprep.subr.mxu0 0.0
    %536 = vmatpush1.msra.mxu0 0.0
    %537 = vmatprep.subr.mxu0 0.0
    %538 = vmatpush1.msra.mxu0 0.0
    %539 = vmatprep.subr.mxu0 0.0
    %540 = vmatpush1.msra.mxu0 0.0
    %541 = vmatprep.subr.mxu0 0.0
    %542 = vmatpush1.msra.mxu0 0.0
    %543 = vmatprep.subr.mxu0 0.0
    %544 = vmatpush1.msra.mxu0 0.0
    %545 = vmatprep.subr.mxu0 0.0
    %546 = vmatpush1.msra.mxu0 0.0
    %547 = vmatprep.subr.mxu0 0.0
    %548 = vmatpush1.msra.mxu0 0.0
    %549 = vmatprep.subr.mxu0 0.0
    %550 = vmatpush1.msra.mxu0 0.0
    %551 = vmatprep.subr.mxu0 0.0
    %552 = vmatpush1.msra.mxu0 0.0
    %553 = vmatprep.subr.mxu0 0.0
    %554 = vmatpush1.msra.mxu0 0.0
    %555 = vmatprep.subr.mxu0 0.0
    %556 = vmatpush1.msra.mxu0 0.0
    %557 = vmatprep.subr.mxu0 0.0
    %558 = vmatpush1.msra.mxu0 0.0
    %559 = vmatprep.subr.mxu0 0.0
    %560 = vmatpush1.msra.mxu0 0.0
    %561 = vmatprep.subr.mxu0 0.0
    %562 = vmatpush1.msra.mxu0 0.0
    %563 = vmatprep.subr.mxu0 0.0
    %564 = vmatpush1.msra.mxu0 0.0
    %565 = vmatprep.subr.mxu0 0.0
    %566 = vmatpush1.msra.mxu0 0.0
    %567 = vmatprep.subr.mxu0 0.0
    %568 = vmatpush1.msra.mxu0 0.0
    %569 = vmatprep.subr.mxu0 0.0
    %570 = vmatpush1.msra.mxu0 0.0
    %571 = vmatprep.subr.mxu0 0.0
    %572 = vmatpush1.msra.mxu0 0.0
    %573 = vmatprep.subr.mxu0 0.0
    %574 = vmatpush1.msra.mxu0 0.0
    %575 = vmatprep.subr.mxu0 0.0
    %576 = vmatpush1.msra.mxu0 0.0
    %577 = vmatprep.mubr.f32.mxu0 0.0
    %578 = vmatmul.mubr.f32.gmra.mrb[0].mxu0 %v511
    %v579 = vpop.f32.mrb[0].mxu0
    %v580 = vadd.f32 %v508, %v579
    %v581 = vpop.f32.mrb[0].mxu0
    %582 = vdwg.mxu0
    %v583 = vld [vmem:[%s3] sm:$0xff]
    %v584 = vld [vmem:[%s3 + $0x8] sm:$0xff]
    %v585 = vld [vmem:[%s3 + $0x10] sm:$0xff]
    %v586 = vld [vmem:[%s3 + $0x18] sm:$0xff]
    %v587 = vld [vmem:[%s3 + $0x20] sm:$0xff]
    %v588 = vld [vmem:[%s3 + $0x28] sm:$0xff]
    %v589 = vld [vmem:[%s3 + $0x30] sm:$0xff]
    %v590 = vld [vmem:[%s3 + $0x38] sm:$0xff]
    %v591 = vld [vmem:[%s3 + $0x40] sm:$0xff]
    %v592 = vld [vmem:[%s3 + $0x48] sm:$0xff]
    %v593 = vld [vmem:[%s3 + $0x50] sm:$0xff]
    %v594 = vld [vmem:[%s3 + $0x58] sm:$0xff]
    %v595 = vld [vmem:[%s3 + $0x60] sm:$0xff]
    %v596 = vld [vmem:[%s3 + $0x68] sm:$0xff]
    %v597 = vld [vmem:[%s3 + $0x70] sm:$0xff]
    %v598 = vld [vmem:[%s3 + $0x78] sm:$0xff]
    %v599 = vlaneseq
    %v600 = vshrl.u32 %v599, 7
    %v601 = vsub.s32 0, %v600
    %v602 = vrot.slane %v53, %v601
    %603 = vmatprep.subr.mxu0 0.0
    %604 = vmatpush1.msra.mxu0 %v583
    %605 = vmatprep.subr.mxu0 0.0
    %606 = vmatpush1.msra.mxu0 %v584
    %607 = vmatprep.subr.mxu0 0.0
    %608 = vmatpush1.msra.mxu0 %v585
    %609 = vmatprep.subr.mxu0 0.0
    %610 = vmatpush1.msra.mxu0 %v586
    %611 = vmatprep.subr.mxu0 0.0
    %612 = vmatpush1.msra.mxu0 %v587
    %613 = vmatprep.subr.mxu0 0.0
    %614 = vmatpush1.msra.mxu0 %v588
    %615 = vmatprep.subr.mxu0 0.0
    %616 = vmatpush1.msra.mxu0 %v589
    %617 = vmatprep.subr.mxu0 0.0
    %618 = vmatpush1.msra.mxu0 %v590
    %619 = vmatprep.subr.mxu0 0.0
    %620 = vmatpush1.msra.mxu0 %v591
    %621 = vmatprep.subr.mxu0 0.0
    %622 = vmatpush1.msra.mxu0 %v592
    %623 = vmatprep.subr.mxu0 0.0
    %624 = vmatpush1.msra.mxu0 %v593
    %625 = vmatprep.subr.mxu0 0.0
    %626 = vmatpush1.msra.mxu0 %v594
    %627 = vmatprep.subr.mxu0 0.0
    %628 = vmatpush1.msra.mxu0 %v595
    %629 = vmatprep.subr.mxu0 0.0
    %630 = vmatpush1.msra.mxu0 %v596
    %631 = vmatprep.subr.mxu0 0.0
    %632 = vmatpush1.msra.mxu0 %v597
    %633 = vmatprep.subr.mxu0 0.0
    %634 = vmatpush1.msra.mxu0 %v598
    %635 = vmatprep.subr.mxu0 0.0
    %636 = vmatpush1.msra.mxu0 0.0
    %637 = vmatprep.subr.mxu0 0.0
    %638 = vmatpush1.msra.mxu0 0.0
    %639 = vmatprep.subr.mxu0 0.0
    %640 = vmatpush1.msra.mxu0 0.0
    %641 = vmatprep.subr.mxu0 0.0
    %642 = vmatpush1.msra.mxu0 0.0
    %643 = vmatprep.subr.mxu0 0.0
    %644 = vmatpush1.msra.mxu0 0.0
    %645 = vmatprep.subr.mxu0 0.0
    %646 = vmatpush1.msra.mxu0 0.0
    %647 = vmatprep.subr.mxu0 0.0
    %648 = vmatpush1.msra.mxu0 0.0
    %649 = vmatprep.subr.mxu0 0.0
    %650 = vmatpush1.msra.mxu0 0.0
    %651 = vmatprep.subr.mxu0 0.0
    %652 = vmatpush1.msra.mxu0 0.0
    %653 = vmatprep.subr.mxu0 0.0
    %654 = vmatpush1.msra.mxu0 0.0
    %655 = vmatprep.subr.mxu0 0.0
    %656 = vmatpush1.msra.mxu0 0.0
    %657 = vmatprep.subr.mxu0 0.0
    %658 = vmatpush1.msra.mxu0 0.0
    %659 = vmatprep.subr.mxu0 0.0
    %660 = vmatpush1.msra.mxu0 0.0
    %661 = vmatprep.subr.mxu0 0.0
    %662 = vmatpush1.msra.mxu0 0.0
    %663 = vmatprep.subr.mxu0 0.0
    %664 = vmatpush1.msra.mxu0 0.0
    %665 = vmatprep.subr.mxu0 0.0
    %666 = vmatpush1.msra.mxu0 0.0
    %667 = vmatprep.mubr.f32.mxu0 0.0
    %668 = vmatmul.mubr.f32.gmra.mrb[0].mxu0 %v50
    %v669 = vpop.f32.mrb[0].mxu0
    %v670 = vadd.f32 %v602, %v669
    %v671 = vpop.f32.mrb[0].mxu0
    %672 = vdwg.mxu0
    %vm673 = vcmask 15360
    %v675 = vsel %vm673, %v126, 0
    %v678 = vsel %vm673, %v127, 0
    %v681 = vsel %vm673, %v128, 0
    %v684 = vsel %vm673, %v129, 0
    %v687 = vsel %vm673, %v130, 0
    %v690 = vsel %vm673, %v131, 0
    %v693 = vsel %vm673, %v132, 0
    %v696 = vsel %vm673, %v133, 0
    %v699 = vsel %vm673, %v134, 0
    %v702 = vsel %vm673, %v135, 0
    %v705 = vsel %vm673, %v136, 0
    %v708 = vsel %vm673, %v137, 0
    %v711 = vsel %vm673, %v138, 0
    %v714 = vsel %vm336, %v670, 0
    %716 = vmatprep.subr.mxu0 0.0
    %717 = vmatpush1.msra.mxu0 %v714
    %718 = vmatprep.subr.mxu0 0.0
    %719 = vmatpush1.msra.mxu0 0.0
    %720 = vmatprep.subr.mxu0 0.0
    %721 = vmatpush1.msra.mxu0 0.0
    %722 = vmatprep.subr.mxu0 0.0
    %723 = vmatpush1.msra.mxu0 0.0
    %724 = vmatprep.subr.mxu0 0.0
    %725 = vmatpush1.msra.mxu0 0.0
    %726 = vmatprep.subr.mxu0 0.0
    %727 = vmatpush1.msra.mxu0 0.0
    %728 = vmatprep.subr.mxu0 0.0
    %729 = vmatpush1.msra.mxu0 0.0
    %730 = vmatprep.subr.mxu0 0.0
    %731 = vmatpush1.msra.mxu0 0.0
    %732 = vmatprep.subr.mxu0 0.0
    %733 = vmatpush1.msra.mxu0 0.0
    %734 = vmatprep.subr.mxu0 0.0
    %735 = vmatpush1.msra.mxu0 0.0
    %736 = vmatprep.subr.mxu0 0.0
    %737 = vmatpush1.msra.mxu0 0.0
    %738 = vmatprep.subr.mxu0 0.0
    %739 = vmatpush1.msra.mxu0 0.0
    %740 = vmatprep.subr.mxu0 0.0
    %741 = vmatpush1.msra.mxu0 0.0
    %742 = vmatprep.subr.mxu0 0.0
    %743 = vmatpush1.msra.mxu0 0.0
    %744 = vmatprep.subr.mxu0 0.0
    %745 = vmatpush1.msra.mxu0 0.0
    %746 = vmatprep.subr.mxu0 0.0
    %747 = vmatpush1.msra.mxu0 0.0
    %748 = vmatprep.subr.mxu0 0.0
    %749 = vmatpush1.msra.mxu0 0.0
    %750 = vmatprep.subr.mxu0 0.0
    %751 = vmatpush1.msra.mxu0 0.0
    %752 = vmatprep.subr.mxu0 0.0
    %753 = vmatpush1.msra.mxu0 0.0
    %754 = vmatprep.subr.mxu0 0.0
    %755 = vmatpush1.msra.mxu0 0.0
    %756 = vmatprep.subr.mxu0 0.0
    %757 = vmatpush1.msra.mxu0 0.0
    %758 = vmatprep.subr.mxu0 0.0
    %759 = vmatpush1.msra.mxu0 0.0
    %760 = vmatprep.subr.mxu0 0.0
    %761 = vmatpush1.msra.mxu0 0.0
    %762 = vmatprep.subr.mxu0 0.0
    %763 = vmatpush1.msra.mxu0 0.0
    %764 = vmatprep.subr.mxu0 0.0
    %765 = vmatpush1.msra.mxu0 0.0
    %766 = vmatprep.subr.mxu0 0.0
    %767 = vmatpush1.msra.mxu0 0.0
    %768 = vmatprep.subr.mxu0 0.0
    %769 = vmatpush1.msra.mxu0 0.0
    %770 = vmatprep.subr.mxu0 0.0
    %771 = vmatpush1.msra.mxu0 0.0
    %772 = vmatprep.subr.mxu0 0.0
    %773 = vmatpush1.msra.mxu0 0.0
    %774 = vmatprep.subr.mxu0 0.0
    %775 = vmatpush1.msra.mxu0 0.0
    %776 = vmatprep.subr.mxu0 0.0
    %777 = vmatpush1.msra.mxu0 0.0
    %778 = vmatprep.subr.mxu0 0.0
    %779 = vmatpush1.msra.mxu0 0.0
    %780 = vmatprep.mubr.f32.mxu0 0.0
    %781 = vmatmul.mubr.f32.gmra.mrb[0].mxu0 %v675
    %v782 = vpop.f32.mrb[0].mxu0
    %v783 = vadd.f32 0.0, %v782
    %v784 = vpop.f32.mrb[0].mxu0
    %785 = vmatprep.mubr.f32.mxu0 0.0
    %786 = vmatmul.mubr.f32.gmra.mrb[0].mxu0 %v678
    %v787 = vpop.f32.mrb[0].mxu0
    %v788 = vadd.f32 0.0, %v787
    %v789 = vpop.f32.mrb[0].mxu0
    %790 = vmatprep.mubr.f32.mxu0 0.0
    %791 = vmatmul.mubr.f32.gmra.mrb[0].mxu0 %v681
    %v792 = vpop.f32.mrb[0].mxu0
    %v793 = vadd.f32 0.0, %v792
    %v794 = vpop.f32.mrb[0].mxu0
    %795 = vmatprep.mubr.f32.mxu0 0.0
    %796 = vmatmul.mubr.f32.gmra.mrb[0].mxu0 %v684
    %v797 = vpop.f32.mrb[0].mxu0
    %v798 = vadd.f32 0.0, %v797
    %v799 = vpop.f32.mrb[0].mxu0
    %800 = vmatprep.mubr.f32.mxu0 0.0
    %801 = vmatmul.mubr.f32.gmra.mrb[0].mxu0 %v687
    %v802 = vpop.f32.mrb[0].mxu0
    %v803 = vadd.f32 0.0, %v802
    %v804 = vpop.f32.mrb[0].mxu0
    %805 = vmatprep.mubr.f32.mxu0 0.0
    %806 = vmatmul.mubr.f32.gmra.mrb[0].mxu0 %v690
    %v807 = vpop.f32.mrb[0].mxu0
    %v808 = vadd.f32 0.0, %v807
    %v809 = vpop.f32.mrb[0].mxu0
    %810 = vmatprep.mubr.f32.mxu0 0.0
    %811 = vmatmul.mubr.f32.gmra.mrb[0].mxu0 %v693
    %v812 = vpop.f32.mrb[0].mxu0
    %v813 = vadd.f32 0.0, %v812
    %v814 = vpop.f32.mrb[0].mxu0
    %815 = vmatprep.mubr.f32.mxu0 0.0
    %816 = vmatmul.mubr.f32.gmra.mrb[0].mxu0 %v696
    %v817 = vpop.f32.mrb[0].mxu0
    %v818 = vadd.f32 0.0, %v817
    %v819 = vpop.f32.mrb[0].mxu0
    %820 = vmatprep.mubr.f32.mxu0 0.0
    %821 = vmatmul.mubr.f32.gmra.mrb[0].mxu0 %v699
    %v822 = vpop.f32.mrb[0].mxu0
    %v823 = vadd.f32 0.0, %v822
    %v824 = vpop.f32.mrb[0].mxu0
    %825 = vmatprep.mubr.f32.mxu0 0.0
    %826 = vmatmul.mubr.f32.gmra.mrb[0].mxu0 %v702
    %v827 = vpop.f32.mrb[0].mxu0
    %v828 = vadd.f32 0.0, %v827
    %v829 = vpop.f32.mrb[0].mxu0
    %830 = vmatprep.mubr.f32.mxu0 0.0
    %831 = vmatmul.mubr.f32.gmra.mrb[0].mxu0 %v705
    %v832 = vpop.f32.mrb[0].mxu0
    %v833 = vadd.f32 0.0, %v832
    %v834 = vpop.f32.mrb[0].mxu0
    %835 = vmatprep.mubr.f32.mxu0 0.0
    %836 = vmatmul.mubr.f32.gmra.mrb[0].mxu0 %v708
    %v837 = vpop.f32.mrb[0].mxu0
    %v838 = vadd.f32 0.0, %v837
    %v839 = vpop.f32.mrb[0].mxu0
    %840 = vmatprep.mubr.f32.mxu0 0.0
    %841 = vmatmul.mubr.f32.gmra.mrb[0].mxu0 %v711
    %v842 = vpop.f32.mrb[0].mxu0
    %v843 = vadd.f32 0.0, %v842
    %v844 = vpop.f32.mrb[0].mxu0
    %845 = vdwg.mxu0
    %846 = vmatprep.subr.mxu0 0.0
    %847 = vmatpush1.msra.mxu0 %v583
    %848 = vmatprep.subr.mxu0 0.0
    %849 = vmatpush1.msra.mxu0 %v584
    %850 = vmatprep.subr.mxu0 0.0
    %851 = vmatpush1.msra.mxu0 %v585
    %852 = vmatprep.subr.mxu0 0.0
    %853 = vmatpush1.msra.mxu0 %v586
    %854 = vmatprep.subr.mxu0 0.0
    %855 = vmatpush1.msra.mxu0 %v587
    %856 = vmatprep.subr.mxu0 0.0
    %857 = vmatpush1.msra.mxu0 %v588
    %858 = vmatprep.subr.mxu0 0.0
    %859 = vmatpush1.msra.mxu0 %v589
    %860 = vmatprep.subr.mxu0 0.0
    %861 = vmatpush1.msra.mxu0 %v590
    %862 = vmatprep.subr.mxu0 0.0
    %863 = vmatpush1.msra.mxu0 %v591
    %864 = vmatprep.subr.mxu0 0.0
    %865 = vmatpush1.msra.mxu0 %v592
    %866 = vmatprep.subr.mxu0 0.0
    %867 = vmatpush1.msra.mxu0 %v593
    %868 = vmatprep.subr.mxu0 0.0
    %869 = vmatpush1.msra.mxu0 %v594
    %870 = vmatprep.subr.mxu0 0.0
    %871 = vmatpush1.msra.mxu0 %v595
    %872 = vmatprep.subr.mxu0 0.0
    %873 = vmatpush1.msra.mxu0 %v596
    %874 = vmatprep.subr.mxu0 0.0
    %875 = vmatpush1.msra.mxu0 %v597
    %876 = vmatprep.subr.mxu0 0.0
    %877 = vmatpush1.msra.mxu0 %v598
    %878 = vmatprep.subr.mxu0 0.0
    %879 = vmatpush1.msra.mxu0 0.0
    %880 = vmatprep.subr.mxu0 0.0
    %881 = vmatpush1.msra.mxu0 0.0
    %882 = vmatprep.subr.mxu0 0.0
    %883 = vmatpush1.msra.mxu0 0.0
    %884 = vmatprep.subr.mxu0 0.0
    %885 = vmatpush1.msra.mxu0 0.0
    %886 = vmatprep.subr.mxu0 0.0
    %887 = vmatpush1.msra.mxu0 0.0
    %888 = vmatprep.subr.mxu0 0.0
    %889 = vmatpush1.msra.mxu0 0.0
    %890 = vmatprep.subr.mxu0 0.0
    %891 = vmatpush1.msra.mxu0 0.0
    %892 = vmatprep.subr.mxu0 0.0
    %893 = vmatpush1.msra.mxu0 0.0
    %894 = vmatprep.subr.mxu0 0.0
    %895 = vmatpush1.msra.mxu0 0.0
    %896 = vmatprep.subr.mxu0 0.0
    %897 = vmatpush1.msra.mxu0 0.0
    %898 = vmatprep.subr.mxu0 0.0
    %899 = vmatpush1.msra.mxu0 0.0
    %900 = vmatprep.subr.mxu0 0.0
    %901 = vmatpush1.msra.mxu0 0.0
    %902 = vmatprep.subr.mxu0 0.0
    %903 = vmatpush1.msra.mxu0 0.0
    %904 = vmatprep.subr.mxu0 0.0
    %905 = vmatpush1.msra.mxu0 0.0
    %906 = vmatprep.subr.mxu0 0.0
    %907 = vmatpush1.msra.mxu0 0.0
    %908 = vmatprep.subr.mxu0 0.0
    %909 = vmatpush1.msra.mxu0 0.0
    %910 = vmatprep.mubr.f32.mxu0 0.0
    %911 = vmatmul.mubr.f32.gmra.mrb[0].mxu0 %v269
    %v912 = vpop.f32.mrb[0].mxu0
    %v913 = vadd.f32 %v783, %v912
    %v914 = vpop.f32.mrb[0].mxu0
    %915 = vmatprep.mubr.f32.mxu0 0.0
    %916 = vmatmul.mubr.f32.gmra.mrb[0].mxu0 %v274
    %v917 = vpop.f32.mrb[0].mxu0
    %v918 = vadd.f32 %v788, %v917
    %v919 = vpop.f32.mrb[0].mxu0
    %920 = vmatprep.mubr.f32.mxu0 0.0
    %921 = vmatmul.mubr.f32.gmra.mrb[0].mxu0 %v279
    %v922 = vpop.f32.mrb[0].mxu0
    %v923 = vadd.f32 %v793, %v922
    %v924 = vpop.f32.mrb[0].mxu0
    %925 = vmatprep.mubr.f32.mxu0 0.0
    %926 = vmatmul.mubr.f32.gmra.mrb[0].mxu0 %v284
    %v927 = vpop.f32.mrb[0].mxu0
    %v928 = vadd.f32 %v798, %v927
    %v929 = vpop.f32.mrb[0].mxu0
    %930 = vmatprep.mubr.f32.mxu0 0.0
    %931 = vmatmul.mubr.f32.gmra.mrb[0].mxu0 %v289
    %v932 = vpop.f32.mrb[0].mxu0
    %v933 = vadd.f32 %v803, %v932
    %v934 = vpop.f32.mrb[0].mxu0
    %935 = vmatprep.mubr.f32.mxu0 0.0
    %936 = vmatmul.mubr.f32.gmra.mrb[0].mxu0 %v294
    %v937 = vpop.f32.mrb[0].mxu0
    %v938 = vadd.f32 %v808, %v937
    %v939 = vpop.f32.mrb[0].mxu0
    %940 = vmatprep.mubr.f32.mxu0 0.0
    %941 = vmatmul.mubr.f32.gmra.mrb[0].mxu0 %v299
    %v942 = vpop.f32.mrb[0].mxu0
    %v943 = vadd.f32 %v813, %v942
    %v944 = vpop.f32.mrb[0].mxu0
    %945 = vmatprep.mubr.f32.mxu0 0.0
    %946 = vmatmul.mubr.f32.gmra.mrb[0].mxu0 %v304
    %v947 = vpop.f32.mrb[0].mxu0
    %v948 = vadd.f32 %v818, %v947
    %v949 = vpop.f32.mrb[0].mxu0
    %950 = vmatprep.mubr.f32.mxu0 0.0
    %951 = vmatmul.mubr.f32.gmra.mrb[0].mxu0 %v309
    %v952 = vpop.f32.mrb[0].mxu0
    %v953 = vadd.f32 %v823, %v952
    %v954 = vpop.f32.mrb[0].mxu0
    %955 = vmatprep.mubr.f32.mxu0 0.0
    %956 = vmatmul.mubr.f32.gmra.mrb[0].mxu0 %v314
    %v957 = vpop.f32.mrb[0].mxu0
    %v958 = vadd.f32 %v828, %v957
    %v959 = vpop.f32.mrb[0].mxu0
    %960 = vmatprep.mubr.f32.mxu0 0.0
    %961 = vmatmul.mubr.f32.gmra.mrb[0].mxu0 %v319
    %v962 = vpop.f32.mrb[0].mxu0
    %v963 = vadd.f32 %v833, %v962
    %v964 = vpop.f32.mrb[0].mxu0
    %965 = vmatprep.mubr.f32.mxu0 0.0
    %966 = vmatmul.mubr.f32.gmra.mrb[0].mxu0 %v324
    %v967 = vpop.f32.mrb[0].mxu0
    %v968 = vadd.f32 %v838, %v967
    %v969 = vpop.f32.mrb[0].mxu0
    %970 = vmatprep.mubr.f32.mxu0 0.0
    %971 = vmatmul.mubr.f32.gmra.mrb[0].mxu0 %v329
    %v972 = vpop.f32.mrb[0].mxu0
    %v973 = vadd.f32 %v843, %v972
    %v974 = vpop.f32.mrb[0].mxu0
    %975 = vdwg.mxu0
    %v976 = vmax.f32 %v913, 0.0
    %v977 = vmax.f32 %v918, 0.0
    %v978 = vmax.f32 %v923, 0.0
    %v979 = vmax.f32 %v928, 0.0
    %v980 = vmax.f32 %v933, 0.0
    %v981 = vmax.f32 %v938, 0.0
    %v982 = vmax.f32 %v943, 0.0
    %v983 = vmax.f32 %v948, 0.0
    %v984 = vmax.f32 %v953, 0.0
    %v985 = vmax.f32 %v958, 0.0
    %v986 = vmax.f32 %v963, 0.0
    %v987 = vmax.f32 %v968, 0.0
    %v988 = vmax.f32 %v973, 0.0
    %v989 = vld [vmem:[%s5] sm:$0xff]
    %v990 = vld [vmem:[%s5 + $0x8] sm:$0xff]
    %v991 = vld [vmem:[%s5 + $0x10] sm:$0xff]
    %v992 = vld [vmem:[%s5 + $0x18] sm:$0xff]
    %v994 = vsel %vm336, %v580, 0
    %996 = vmatprep.subr.mxu0 0.0
    %997 = vmatpush1.msra.mxu0 %v994
    %998 = vmatprep.subr.mxu0 0.0
    %999 = vmatpush1.msra.mxu0 0.0
    %1000 = vmatprep.subr.mxu0 0.0
    %1001 = vmatpush1.msra.mxu0 0.0
    %1002 = vmatprep.subr.mxu0 0.0
    %1003 = vmatpush1.msra.mxu0 0.0
    %1004 = vmatprep.subr.mxu0 0.0
    %1005 = vmatpush1.msra.mxu0 0.0
    %1006 = vmatprep.subr.mxu0 0.0
    %1007 = vmatpush1.msra.mxu0 0.0
    %1008 = vmatprep.subr.mxu0 0.0
    %1009 = vmatpush1.msra.mxu0 0.0
    %1010 = vmatprep.subr.mxu0 0.0
    %1011 = vmatpush1.msra.mxu0 0.0
    %1012 = vmatprep.subr.mxu0 0.0
    %1013 = vmatpush1.msra.mxu0 0.0
    %1014 = vmatprep.subr.mxu0 0.0
    %1015 = vmatpush1.msra.mxu0 0.0
    %1016 = vmatprep.subr.mxu0 0.0
    %1017 = vmatpush1.msra.mxu0 0.0
    %1018 = vmatprep.subr.mxu0 0.0
    %1019 = vmatpush1.msra.mxu0 0.0
    %1020 = vmatprep.subr.mxu0 0.0
    %1021 = vmatpush1.msra.mxu0 0.0
    %1022 = vmatprep.subr.mxu0 0.0
    %1023 = vmatpush1.msra.mxu0 0.0
    %1024 = vmatprep.subr.mxu0 0.0
    %1025 = vmatpush1.msra.mxu0 0.0
    %1026 = vmatprep.subr.mxu0 0.0
    %1027 = vmatpush1.msra.mxu0 0.0
    %1028 = vmatprep.subr.mxu0 0.0
    %1029 = vmatpush1.msra.mxu0 0.0
    %1030 = vmatprep.subr.mxu0 0.0
    %1031 = vmatpush1.msra.mxu0 0.0
    %1032 = vmatprep.subr.mxu0 0.0
    %1033 = vmatpush1.msra.mxu0 0.0
    %1034 = vmatprep.subr.mxu0 0.0
    %1035 = vmatpush1.msra.mxu0 0.0
    %1036 = vmatprep.subr.mxu0 0.0
    %1037 = vmatpush1.msra.mxu0 0.0
    %1038 = vmatprep.subr.mxu0 0.0
    %1039 = vmatpush1.msra.mxu0 0.0
    %1040 = vmatprep.subr.mxu0 0.0
    %1041 = vmatpush1.msra.mxu0 0.0
    %1042 = vmatprep.subr.mxu0 0.0
    %1043 = vmatpush1.msra.mxu0 0.0
    %1044 = vmatprep.subr.mxu0 0.0
    %1045 = vmatpush1.msra.mxu0 0.0
    %1046 = vmatprep.subr.mxu0 0.0
    %1047 = vmatpush1.msra.mxu0 0.0
    %1048 = vmatprep.subr.mxu0 0.0
    %1049 = vmatpush1.msra.mxu0 0.0
    %1050 = vmatprep.subr.mxu0 0.0
    %1051 = vmatpush1.msra.mxu0 0.0
    %1052 = vmatprep.subr.mxu0 0.0
    %1053 = vmatpush1.msra.mxu0 0.0
    %1054 = vmatprep.subr.mxu0 0.0
    %1055 = vmatpush1.msra.mxu0 0.0
    %1056 = vmatprep.subr.mxu0 0.0
    %1057 = vmatpush1.msra.mxu0 0.0
    %1058 = vmatprep.subr.mxu0 0.0
    %1059 = vmatpush1.msra.mxu0 0.0
    %1060 = vmatprep.mubr.f32.mxu0 0.0
    %1061 = vmatmul.mubr.f32.gmra.mrb[0].mxu0 %v675
    %v1062 = vpop.f32.mrb[0].mxu0
    %v1063 = vadd.f32 0.0, %v1062
    %v1064 = vpop.f32.mrb[0].mxu0
    %1065 = vmatprep.mubr.f32.mxu0 0.0
    %1066 = vmatmul.mubr.f32.gmra.mrb[0].mxu0 %v678
    %v1067 = vpop.f32.mrb[0].mxu0
    %v1068 = vadd.f32 0.0, %v1067
    %v1069 = vpop.f32.mrb[0].mxu0
    %1070 = vmatprep.mubr.f32.mxu0 0.0
    %1071 = vmatmul.mubr.f32.gmra.mrb[0].mxu0 %v681
    %v1072 = vpop.f32.mrb[0].mxu0
    %v1073 = vadd.f32 0.0, %v1072
    %v1074 = vpop.f32.mrb[0].mxu0
    %1075 = vmatprep.mubr.f32.mxu0 0.0
    %1076 = vmatmul.mubr.f32.gmra.mrb[0].mxu0 %v684
    %v1077 = vpop.f32.mrb[0].mxu0
    %v1078 = vadd.f32 0.0, %v1077
    %v1079 = vpop.f32.mrb[0].mxu0
    %1080 = vmatprep.mubr.f32.mxu0 0.0
    %1081 = vmatmul.mubr.f32.gmra.mrb[0].mxu0 %v687
    %v1082 = vpop.f32.mrb[0].mxu0
    %v1083 = vadd.f32 0.0, %v1082
    %v1084 = vpop.f32.mrb[0].mxu0
    %1085 = vmatprep.mubr.f32.mxu0 0.0
    %1086 = vmatmul.mubr.f32.gmra.mrb[0].mxu0 %v690
    %v1087 = vpop.f32.mrb[0].mxu0
    %v1088 = vadd.f32 0.0, %v1087
    %v1089 = vpop.f32.mrb[0].mxu0
    %1090 = vmatprep.mubr.f32.mxu0 0.0
    %1091 = vmatmul.mubr.f32.gmra.mrb[0].mxu0 %v693
    %v1092 = vpop.f32.mrb[0].mxu0
    %v1093 = vadd.f32 0.0, %v1092
    %v1094 = vpop.f32.mrb[0].mxu0
    %1095 = vmatprep.mubr.f32.mxu0 0.0
    %1096 = vmatmul.mubr.f32.gmra.mrb[0].mxu0 %v696
    %v1097 = vpop.f32.mrb[0].mxu0
    %v1098 = vadd.f32 0.0, %v1097
    %v1099 = vpop.f32.mrb[0].mxu0
    %1100 = vmatprep.mubr.f32.mxu0 0.0
    %1101 = vmatmul.mubr.f32.gmra.mrb[0].mxu0 %v699
    %v1102 = vpop.f32.mrb[0].mxu0
    %v1103 = vadd.f32 0.0, %v1102
    %v1104 = vpop.f32.mrb[0].mxu0
    %1105 = vmatprep.mubr.f32.mxu0 0.0
    %1106 = vmatmul.mubr.f32.gmra.mrb[0].mxu0 %v702
    %v1107 = vpop.f32.mrb[0].mxu0
    %v1108 = vadd.f32 0.0, %v1107
    %v1109 = vpop.f32.mrb[0].mxu0
    %1110 = vmatprep.mubr.f32.mxu0 0.0
    %1111 = vmatmul.mubr.f32.gmra.mrb[0].mxu0 %v705
    %v1112 = vpop.f32.mrb[0].mxu0
    %v1113 = vadd.f32 0.0, %v1112
    %v1114 = vpop.f32.mrb[0].mxu0
    %1115 = vmatprep.mubr.f32.mxu0 0.0
    %1116 = vmatmul.mubr.f32.gmra.mrb[0].mxu0 %v708
    %v1117 = vpop.f32.mrb[0].mxu0
    %v1118 = vadd.f32 0.0, %v1117
    %v1119 = vpop.f32.mrb[0].mxu0
    %1120 = vmatprep.mubr.f32.mxu0 0.0
    %1121 = vmatmul.mubr.f32.gmra.mrb[0].mxu0 %v711
    %v1122 = vpop.f32.mrb[0].mxu0
    %v1123 = vadd.f32 0.0, %v1122
    %v1124 = vpop.f32.mrb[0].mxu0
    %1125 = vdwg.mxu0
    %v1127 = vsel %vm509, %v976, 0
    %v1130 = vsel %vm509, %v977, 0
    %v1133 = vsel %vm509, %v978, 0
    %v1136 = vsel %vm509, %v979, 0
    %v1139 = vsel %vm509, %v980, 0
    %v1142 = vsel %vm509, %v981, 0
    %v1145 = vsel %vm509, %v982, 0
    %v1148 = vsel %vm509, %v983, 0
    %v1151 = vsel %vm509, %v984, 0
    %v1154 = vsel %vm509, %v985, 0
    %v1157 = vsel %vm509, %v986, 0
    %v1160 = vsel %vm509, %v987, 0
    %v1163 = vsel %vm509, %v988, 0
    %1165 = vmatprep.subr.mxu0 0.0
    %1166 = vmatpush1.msra.mxu0 %v989
    %1167 = vmatprep.subr.mxu0 0.0
    %1168 = vmatpush1.msra.mxu0 %v990
    %1169 = vmatprep.subr.mxu0 0.0
    %1170 = vmatpush1.msra.mxu0 %v991
    %1171 = vmatprep.subr.mxu0 0.0
    %1172 = vmatpush1.msra.mxu0 %v992
    %1173 = vmatprep.subr.mxu0 0.0
    %1174 = vmatpush1.msra.mxu0 0.0
    %1175 = vmatprep.subr.mxu0 0.0
    %1176 = vmatpush1.msra.mxu0 0.0
    %1177 = vmatprep.subr.mxu0 0.0
    %1178 = vmatpush1.msra.mxu0 0.0
    %1179 = vmatprep.subr.mxu0 0.0
    %1180 = vmatpush1.msra.mxu0 0.0
    %1181 = vmatprep.subr.mxu0 0.0
    %1182 = vmatpush1.msra.mxu0 0.0
    %1183 = vmatprep.subr.mxu0 0.0
    %1184 = vmatpush1.msra.mxu0 0.0
    %1185 = vmatprep.subr.mxu0 0.0
    %1186 = vmatpush1.msra.mxu0 0.0
    %1187 = vmatprep.subr.mxu0 0.0
    %1188 = vmatpush1.msra.mxu0 0.0
    %1189 = vmatprep.subr.mxu0 0.0
    %1190 = vmatpush1.msra.mxu0 0.0
    %1191 = vmatprep.subr.mxu0 0.0
    %1192 = vmatpush1.msra.mxu0 0.0
    %1193 = vmatprep.subr.mxu0 0.0
    %1194 = vmatpush1.msra.mxu0 0.0
    %1195 = vmatprep.subr.mxu0 0.0
    %1196 = vmatpush1.msra.mxu0 0.0
    %1197 = vmatprep.subr.mxu0 0.0
    %1198 = vmatpush1.msra.mxu0 0.0
    %1199 = vmatprep.subr.mxu0 0.0
    %1200 = vmatpush1.msra.mxu0 0.0
    %1201 = vmatprep.subr.mxu0 0.0
    %1202 = vmatpush1.msra.mxu0 0.0
    %1203 = vmatprep.subr.mxu0 0.0
    %1204 = vmatpush1.msra.mxu0 0.0
    %1205 = vmatprep.subr.mxu0 0.0
    %1206 = vmatpush1.msra.mxu0 0.0
    %1207 = vmatprep.subr.mxu0 0.0
    %1208 = vmatpush1.msra.mxu0 0.0
    %1209 = vmatprep.subr.mxu0 0.0
    %1210 = vmatpush1.msra.mxu0 0.0
    %1211 = vmatprep.subr.mxu0 0.0
    %1212 = vmatpush1.msra.mxu0 0.0
    %1213 = vmatprep.subr.mxu0 0.0
    %1214 = vmatpush1.msra.mxu0 0.0
    %1215 = vmatprep.subr.mxu0 0.0
    %1216 = vmatpush1.msra.mxu0 0.0
    %1217 = vmatprep.subr.mxu0 0.0
    %1218 = vmatpush1.msra.mxu0 0.0
    %1219 = vmatprep.subr.mxu0 0.0
    %1220 = vmatpush1.msra.mxu0 0.0
    %1221 = vmatprep.subr.mxu0 0.0
    %1222 = vmatpush1.msra.mxu0 0.0
    %1223 = vmatprep.subr.mxu0 0.0
    %1224 = vmatpush1.msra.mxu0 0.0
    %1225 = vmatprep.subr.mxu0 0.0
    %1226 = vmatpush1.msra.mxu0 0.0
    %1227 = vmatprep.subr.mxu0 0.0
    %1228 = vmatpush1.msra.mxu0 0.0
    %1229 = vmatprep.mubr.f32.mxu0 0.0
    %1230 = vmatmul.mubr.f32.gmra.mrb[0].mxu0 %v1127
    %v1231 = vpop.f32.mrb[0].mxu0
    %v1232 = vadd.f32 %v1063, %v1231
    %v1233 = vpop.f32.mrb[0].mxu0
    %1234 = vmatprep.mubr.f32.mxu0 0.0
    %1235 = vmatmul.mubr.f32.gmra.mrb[0].mxu0 %v1130
    %v1236 = vpop.f32.mrb[0].mxu0
    %v1237 = vadd.f32 %v1068, %v1236
    %v1238 = vpop.f32.mrb[0].mxu0
    %1239 = vmatprep.mubr.f32.mxu0 0.0
    %1240 = vmatmul.mubr.f32.gmra.mrb[0].mxu0 %v1133
    %v1241 = vpop.f32.mrb[0].mxu0
    %v1242 = vadd.f32 %v1073, %v1241
    %v1243 = vpop.f32.mrb[0].mxu0
    %1244 = vmatprep.mubr.f32.mxu0 0.0
    %1245 = vmatmul.mubr.f32.gmra.mrb[0].mxu0 %v1136
    %v1246 = vpop.f32.mrb[0].mxu0
    %v1247 = vadd.f32 %v1078, %v1246
    %v1248 = vpop.f32.mrb[0].mxu0
    %1249 = vmatprep.mubr.f32.mxu0 0.0
    %1250 = vmatmul.mubr.f32.gmra.mrb[0].mxu0 %v1139
    %v1251 = vpop.f32.mrb[0].mxu0
    %v1252 = vadd.f32 %v1083, %v1251
    %v1253 = vpop.f32.mrb[0].mxu0
    %1254 = vmatprep.mubr.f32.mxu0 0.0
    %1255 = vmatmul.mubr.f32.gmra.mrb[0].mxu0 %v1142
    %v1256 = vpop.f32.mrb[0].mxu0
    %v1257 = vadd.f32 %v1088, %v1256
    %v1258 = vpop.f32.mrb[0].mxu0
    %1259 = vmatprep.mubr.f32.mxu0 0.0
    %1260 = vmatmul.mubr.f32.gmra.mrb[0].mxu0 %v1145
    %v1261 = vpop.f32.mrb[0].mxu0
    %v1262 = vadd.f32 %v1093, %v1261
    %v1263 = vpop.f32.mrb[0].mxu0
    %1264 = vmatprep.mubr.f32.mxu0 0.0
    %1265 = vmatmul.mubr.f32.gmra.mrb[0].mxu0 %v1148
    %v1266 = vpop.f32.mrb[0].mxu0
    %v1267 = vadd.f32 %v1098, %v1266
    %v1268 = vpop.f32.mrb[0].mxu0
    %1269 = vmatprep.mubr.f32.mxu0 0.0
    %1270 = vmatmul.mubr.f32.gmra.mrb[0].mxu0 %v1151
    %v1271 = vpop.f32.mrb[0].mxu0
    %v1272 = vadd.f32 %v1103, %v1271
    %v1273 = vpop.f32.mrb[0].mxu0
    %1274 = vmatprep.mubr.f32.mxu0 0.0
    %1275 = vmatmul.mubr.f32.gmra.mrb[0].mxu0 %v1154
    %v1276 = vpop.f32.mrb[0].mxu0
    %v1277 = vadd.f32 %v1108, %v1276
    %v1278 = vpop.f32.mrb[0].mxu0
    %1279 = vmatprep.mubr.f32.mxu0 0.0
    %1280 = vmatmul.mubr.f32.gmra.mrb[0].mxu0 %v1157
    %v1281 = vpop.f32.mrb[0].mxu0
    %v1282 = vadd.f32 %v1113, %v1281
    %v1283 = vpop.f32.mrb[0].mxu0
    %1284 = vmatprep.mubr.f32.mxu0 0.0
    %1285 = vmatmul.mubr.f32.gmra.mrb[0].mxu0 %v1160
    %v1286 = vpop.f32.mrb[0].mxu0
    %v1287 = vadd.f32 %v1118, %v1286
    %v1288 = vpop.f32.mrb[0].mxu0
    %1289 = vmatprep.mubr.f32.mxu0 0.0
    %1290 = vmatmul.mubr.f32.gmra.mrb[0].mxu0 %v1163
    %v1291 = vpop.f32.mrb[0].mxu0
    %v1292 = vadd.f32 %v1123, %v1291
    %v1293 = vpop.f32.mrb[0].mxu0
    %1294 = vdwg.mxu0
    %v1295 = vxor.u32 %v1232, 2147483648
    %v1296 = vxor.u32 %v1237, 2147483648
    %v1297 = vxor.u32 %v1242, 2147483648
    %v1298 = vxor.u32 %v1247, 2147483648
    %v1299 = vxor.u32 %v1252, 2147483648
    %v1300 = vxor.u32 %v1257, 2147483648
    %v1301 = vxor.u32 %v1262, 2147483648
    %v1302 = vxor.u32 %v1267, 2147483648
    %v1303 = vxor.u32 %v1272, 2147483648
    %v1304 = vxor.u32 %v1277, 2147483648
    %v1305 = vxor.u32 %v1282, 2147483648
    %v1306 = vxor.u32 %v1287, 2147483648
    %v1307 = vxor.u32 %v1292, 2147483648
    %v1308 = vmul.f32 %v1295, 1.442695
    %v1309 = vpow.pop %v1308
    %v1310 = vmul.f32 %v1296, 1.442695
    %v1311 = vpow.pop %v1310
    %v1312 = vmul.f32 %v1297, 1.442695
    %v1313 = vpow.pop %v1312
    %v1314 = vmul.f32 %v1298, 1.442695
    %v1315 = vpow.pop %v1314
    %v1316 = vmul.f32 %v1299, 1.442695
    %v1317 = vpow.pop %v1316
    %v1318 = vmul.f32 %v1300, 1.442695
    %v1319 = vpow.pop %v1318
    %v1320 = vmul.f32 %v1301, 1.442695
    %v1321 = vpow.pop %v1320
    %v1322 = vmul.f32 %v1302, 1.442695
    %v1323 = vpow.pop %v1322
    %v1324 = vmul.f32 %v1303, 1.442695
    %v1325 = vpow.pop %v1324
    %v1326 = vmul.f32 %v1304, 1.442695
    %v1327 = vpow.pop %v1326
    %v1328 = vmul.f32 %v1305, 1.442695
    %v1329 = vpow.pop %v1328
    %v1330 = vmul.f32 %v1306, 1.442695
    %v1331 = vpow.pop %v1330
    %v1332 = vmul.f32 %v1307, 1.442695
    %v1333 = vpow.pop %v1332
    %v1334 = vadd.f32 %v1309, 1.0
    %v1335 = vadd.f32 %v1311, 1.0
    %v1336 = vadd.f32 %v1313, 1.0
    %v1337 = vadd.f32 %v1315, 1.0
    %v1338 = vadd.f32 %v1317, 1.0
    %v1339 = vadd.f32 %v1319, 1.0
    %v1340 = vadd.f32 %v1321, 1.0
    %v1341 = vadd.f32 %v1323, 1.0
    %v1342 = vadd.f32 %v1325, 1.0
    %v1343 = vadd.f32 %v1327, 1.0
    %v1344 = vadd.f32 %v1329, 1.0
    %v1345 = vadd.f32 %v1331, 1.0
    %v1346 = vadd.f32 %v1333, 1.0
    %v1347 = vrcp.pop %v1334
    %v1348 = vmul.f32 1.0, %v1347
    %v1349 = vrcp.pop %v1335
    %v1350 = vmul.f32 1.0, %v1349
    %v1351 = vrcp.pop %v1336
    %v1352 = vmul.f32 1.0, %v1351
    %v1353 = vrcp.pop %v1337
    %v1354 = vmul.f32 1.0, %v1353
    %v1355 = vrcp.pop %v1338
    %v1356 = vmul.f32 1.0, %v1355
    %v1357 = vrcp.pop %v1339
    %v1358 = vmul.f32 1.0, %v1357
    %v1359 = vrcp.pop %v1340
    %v1360 = vmul.f32 1.0, %v1359
    %v1361 = vrcp.pop %v1341
    %v1362 = vmul.f32 1.0, %v1361
    %v1363 = vrcp.pop %v1342
    %v1364 = vmul.f32 1.0, %v1363
    %v1365 = vrcp.pop %v1343
    %v1366 = vmul.f32 1.0, %v1365
    %v1367 = vrcp.pop %v1344
    %v1368 = vmul.f32 1.0, %v1367
    %v1369 = vrcp.pop %v1345
    %v1370 = vmul.f32 1.0, %v1369
    %v1371 = vrcp.pop %v1346
    %v1372 = vmul.f32 1.0, %v1371
    %v1373 = vmul.f32 %v269, %v1348
    %v1374 = vmul.f32 %v274, %v1350
    %v1375 = vmul.f32 %v279, %v1352
    %v1376 = vmul.f32 %v284, %v1354
    %v1377 = vmul.f32 %v289, %v1356
    %v1378 = vmul.f32 %v294, %v1358
    %v1379 = vmul.f32 %v299, %v1360
    %v1380 = vmul.f32 %v304, %v1362
    %v1381 = vmul.f32 %v309, %v1364
    %v1382 = vmul.f32 %v314, %v1366
    %v1383 = vmul.f32 %v319, %v1368
    %v1384 = vmul.f32 %v324, %v1370
    %v1385 = vmul.f32 %v329, %v1372
    %v1387 = vsel %vm336, %v1372, 0
    %1389 = vmatprep.subr.mxu0 0.0
    %1390 = vmatpush1.msra.mxu0 %v1348
    %1391 = vmatprep.subr.mxu0 0.0
    %1392 = vmatpush1.msra.mxu0 %v1350
    %1393 = vmatprep.subr.mxu0 0.0
    %1394 = vmatpush1.msra.mxu0 %v1352
    %1395 = vmatprep.subr.mxu0 0.0
    %1396 = vmatpush1.msra.mxu0 %v1354
    %1397 = vmatprep.subr.mxu0 0.0
    %1398 = vmatpush1.msra.mxu0 %v1356
    %1399 = vmatprep.subr.mxu0 0.0
    %1400 = vmatpush1.msra.mxu0 %v1358
    %1401 = vmatprep.subr.mxu0 0.0
    %1402 = vmatpush1.msra.mxu0 %v1360
    %1403 = vmatprep.subr.mxu0 0.0
    %1404 = vmatpush1.msra.mxu0 %v1362
    %1405 = vmatprep.subr.mxu0 0.0
    %1406 = vmatpush1.msra.mxu0 %v1364
    %1407 = vmatprep.subr.mxu0 0.0
    %1408 = vmatpush1.msra.mxu0 %v1366
    %1409 = vmatprep.subr.mxu0 0.0
    %1410 = vmatpush1.msra.mxu0 %v1368
    %1411 = vmatprep.subr.mxu0 0.0
    %1412 = vmatpush1.msra.mxu0 %v1370
    %1413 = vmatprep.subr.mxu0 0.0
    %1414 = vmatpush1.msra.mxu0 %v1387
    %1415 = vmatprep.subr.mxu0 0.0
    %1416 = vmatpush1.msra.mxu0 0.0
    %1417 = vmatprep.subr.mxu0 0.0
    %1418 = vmatpush1.msra.mxu0 0.0
    %1419 = vmatprep.subr.mxu0 0.0
    %1420 = vmatpush1.msra.mxu0 0.0
    %1421 = vmatprep.subr.mxu0 0.0
    %1422 = vmatpush1.msra.mxu0 0.0
    %1423 = vmatprep.subr.mxu0 0.0
    %1424 = vmatpush1.msra.mxu0 0.0
    %1425 = vmatprep.subr.mxu0 0.0
    %1426 = vmatpush1.msra.mxu0 0.0
    %1427 = vmatprep.subr.mxu0 0.0
    %1428 = vmatpush1.msra.mxu0 0.0
    %1429 = vmatprep.subr.mxu0 0.0
    %1430 = vmatpush1.msra.mxu0 0.0
    %1431 = vmatprep.subr.mxu0 0.0
    %1432 = vmatpush1.msra.mxu0 0.0
    %1433 = vmatprep.subr.mxu0 0.0
    %1434 = vmatpush1.msra.mxu0 0.0
    %1435 = vmatprep.subr.mxu0 0.0
    %1436 = vmatpush1.msra.mxu0 0.0
    %1437 = vmatprep.subr.mxu0 0.0
    %1438 = vmatpush1.msra.mxu0 0.0
    %1439 = vmatprep.subr.mxu0 0.0
    %1440 = vmatpush1.msra.mxu0 0.0
    %1441 = vmatprep.subr.mxu0 0.0
    %1442 = vmatpush1.msra.mxu0 0.0
    %1443 = vmatprep.subr.mxu0 0.0
    %1444 = vmatpush1.msra.mxu0 0.0
    %1445 = vmatprep.subr.mxu0 0.0
    %1446 = vmatpush1.msra.mxu0 0.0
    %1447 = vmatprep.subr.mxu0 0.0
    %1448 = vmatpush1.msra.mxu0 0.0
    %1449 = vmatprep.subr.mxu0 0.0
    %1450 = vmatpush1.msra.mxu0 0.0
    %1451 = vmatprep.subr.mxu0 0.0
    %1452 = vmatpush1.msra.mxu0 0.0
    %1453 = vmatprep.mubr.f32.mxu0 0.0
    %1454 = vmatmul.mubr.f32.gmra.mrb[0].mxu0 %v334
    %v1455 = vpop.f32.mrb[0].mxu0
    %v1456 = vadd.f32 0.0, %v1455
    %v1457 = vpop.f32.mrb[0].mxu0
    %1458 = vdwg.mxu0
    %v1459 = vsub.f32 1.0, %v1456
    %v1460 = vmul.f32 %v50, %v1459
    %v1462 = vsel %vm336, %v1385, 0
    %1464 = vmatprep.subr.mxu0 0.0
    %1465 = vmatpush1.msra.mxu0 %v1373
    %1466 = vmatprep.subr.mxu0 0.0
    %1467 = vmatpush1.msra.mxu0 %v1374
    %1468 = vmatprep.subr.mxu0 0.0
    %1469 = vmatpush1.msra.mxu0 %v1375
    %1470 = vmatprep.subr.mxu0 0.0
    %1471 = vmatpush1.msra.mxu0 %v1376
    %1472 = vmatprep.subr.mxu0 0.0
    %1473 = vmatpush1.msra.mxu0 %v1377
    %1474 = vmatprep.subr.mxu0 0.0
    %1475 = vmatpush1.msra.mxu0 %v1378
    %1476 = vmatprep.subr.mxu0 0.0
    %1477 = vmatpush1.msra.mxu0 %v1379
    %1478 = vmatprep.subr.mxu0 0.0
    %1479 = vmatpush1.msra.mxu0 %v1380
    %1480 = vmatprep.subr.mxu0 0.0
    %1481 = vmatpush1.msra.mxu0 %v1381
    %1482 = vmatprep.subr.mxu0 0.0
    %1483 = vmatpush1.msra.mxu0 %v1382
    %1484 = vmatprep.subr.mxu0 0.0
    %1485 = vmatpush1.msra.mxu0 %v1383
    %1486 = vmatprep.subr.mxu0 0.0
    %1487 = vmatpush1.msra.mxu0 %v1384
    %1488 = vmatprep.subr.mxu0 0.0
    %1489 = vmatpush1.msra.mxu0 %v1462
    %1490 = vmatprep.subr.mxu0 0.0
    %1491 = vmatpush1.msra.mxu0 0.0
    %1492 = vmatprep.subr.mxu0 0.0
    %1493 = vmatpush1.msra.mxu0 0.0
    %1494 = vmatprep.subr.mxu0 0.0
    %1495 = vmatpush1.msra.mxu0 0.0
    %1496 = vmatprep.subr.mxu0 0.0
    %1497 = vmatpush1.msra.mxu0 0.0
    %1498 = vmatprep.subr.mxu0 0.0
    %1499 = vmatpush1.msra.mxu0 0.0
    %1500 = vmatprep.subr.mxu0 0.0
    %1501 = vmatpush1.msra.mxu0 0.0
    %1502 = vmatprep.subr.mxu0 0.0
    %1503 = vmatpush1.msra.mxu0 0.0
    %1504 = vmatprep.subr.mxu0 0.0
    %1505 = vmatpush1.msra.mxu0 0.0
    %1506 = vmatprep.subr.mxu0 0.0
    %1507 = vmatpush1.msra.mxu0 0.0
    %1508 = vmatprep.subr.mxu0 0.0
    %1509 = vmatpush1.msra.mxu0 0.0
    %1510 = vmatprep.subr.mxu0 0.0
    %1511 = vmatpush1.msra.mxu0 0.0
    %1512 = vmatprep.subr.mxu0 0.0
    %1513 = vmatpush1.msra.mxu0 0.0
    %1514 = vmatprep.subr.mxu0 0.0
    %1515 = vmatpush1.msra.mxu0 0.0
    %1516 = vmatprep.subr.mxu0 0.0
    %1517 = vmatpush1.msra.mxu0 0.0
    %1518 = vmatprep.subr.mxu0 0.0
    %1519 = vmatpush1.msra.mxu0 0.0
    %1520 = vmatprep.subr.mxu0 0.0
    %1521 = vmatpush1.msra.mxu0 0.0
    %1522 = vmatprep.subr.mxu0 0.0
    %1523 = vmatpush1.msra.mxu0 0.0
    %1524 = vmatprep.subr.mxu0 0.0
    %1525 = vmatpush1.msra.mxu0 0.0
    %1526 = vmatprep.subr.mxu0 0.0
    %1527 = vmatpush1.msra.mxu0 0.0
    %1528 = vmatprep.mubr.f32.mxu0 0.0
    %1529 = vmatmul.mubr.f32.gmra.mrb[0].mxu0 %v334
    %v1530 = vpop.f32.mrb[0].mxu0
    %v1531 = vadd.f32 %v1460, %v1530
    %v1532 = vpop.f32.mrb[0].mxu0
    %1533 = vdwg.mxu0
    %v1534 = vmul.f32 %v1531, 2.0
    %v1535 = vmul.f32 %v1534, 0.5
    %v1536 = vmul.f32 %v1534, 0.70710677
    %v1537 = verf.f32.pop %v1536
    %v1538 = vadd.f32 %v1537, 1.0
    %v1539 = vmul.f32 %v1535, %v1538
    %s1540 = sld [smem:[#allocation2]]
    %v1541 = vstv %s1540
    %v1542 = vmul.f32 %v1541, %v1539
    %s1543 = ssub.f32 1.0, %s1540
    %v1544 = vstv %s1543
    %v1545 = vmul.f32 %v1544, %v50
    %v1546 = vadd.f32 %v1542, %v1545
    %1547 = vst [vmem:[#allocation3] sm:$0x3] %v1546
    // Predicated region
    $region42: #{tpu_custom_call.1} parent=1 // pred_check
      _
    $region43: #{tpu_custom_call.1} parent=1 // pred_check_branch
      %1549 = sbr.rel (0) target = $region45
    $region44: #{tpu_custom_call.1} parent=1 // pred_region
      %s1551 = ssub.s32 32, 32
      %1552 = vsyncadd [#allocation4], %s1551
      %s1554 = sshll.u32 [#allocation3], 4
      %s1555 = int_to_ptr.vmem [resolvable:$true] %s1554
      %1557 = dma.vmem_to_hbm [thread:$0]  %s1555, 32, %s10, [#allocation4]
    $region45: #{tpu_custom_call.1} parent=1 // pred_fallthru
      _
    // Predicated region
    $region46: #{tpu_custom_call.1} parent=1 // pred_check
      _
    $region47: #{tpu_custom_call.1} parent=1 // pred_check_branch
      %1559 = sbr.rel (0) target = $region49
    $region48: #{tpu_custom_call.1} parent=1 // pred_region
      %1560 = dma.done [#allocation4], 32
    $region49: #{tpu_custom_call.1} parent=1 // pred_fallthru
      _
    %1561 = vsyncpa [#allocation4], 1

</llo_original>
